<compile_context>
chip_gen: v7x
topology: tpu7x:2x2x1
jax: 0.10.0
libtpu: 0.0.40
codegen_flags: <defaults>
</compile_context>

<pallas_src>
import functools

import jax
import jax.numpy as jnp
from jax.experimental import pallas as pl
from jax.experimental.pallas import tpu as pltpu


# ---------------------------------------------------------------------------
# Hardware / tiling helpers
# ---------------------------------------------------------------------------

def _cdiv(a, b):
    return -(-a // b)


def _round_up(x, m):
    return ((x + m - 1) // m) * m


def _vmem_config():
    """Returns (tile_budget_bytes, vmem_limit_bytes) from physical VMEM size."""
    cap = None
    try:
        cap = int(pltpu.get_tpu_info().vmem_capacity_bytes)
    except Exception:
        cap = None
    if not cap:
        kind = ""
        try:
            kind = jax.devices()[0].device_kind.lower()
        except Exception:
            pass
        cap = (64 << 20) if "v7" in kind else (128 << 20)
    # Leave headroom below physical capacity: 128 MiB chips -> 112 MiB limit,
    # 64 MiB (v7x) -> 48 MiB limit.  Tile budget sits a further 8 MiB below.
    limit = max(cap - (16 << 20), (cap * 3) // 4)
    budget = max(limit - (8 << 20), limit // 2)
    return budget, limit


def _tensorcores_per_chip():
    try:
        if "v7" in jax.devices()[0].device_kind.lower():
            return 2
    except Exception:
        pass
    return 1


def _pick_tn(n):
    for c in (512, 256, 128):
        if n % c == 0:
            return c
    return n  # full-extent lane block (always legal)


def _pick_tk(k_dim, tn, w_itemsize, force_tk=None):
    """Weight K tile: keep the double-buffered (tk, tn) weight block <=16 MiB."""
    if force_tk is not None:
        assert k_dim % force_tk == 0, "force_tk must divide K"
        return force_tk
    max_w_bytes = 16 << 20
    if k_dim % 128 != 0 or 2 * k_dim * tn * w_itemsize <= max_w_bytes:
        return k_dim
    for c in (4096, 2048, 1024, 512, 256, 128):
        if k_dim % c == 0 and 2 * c * tn * w_itemsize <= max_w_bytes:
            return c
    return k_dim


def _pick_tm(m_dim, vmem_fn, budget, cap=512):
    """Largest row tile (<= cap) whose estimated VMEM footprint fits budget."""
    m_cap = _round_up(min(max(m_dim, 1), cap), 8)
    cands = sorted({m_cap} | {c for c in (512, 384, 256, 192, 128, 96, 64, 32, 16, 8)
                              if c <= m_cap}, reverse=True)
    for tm in cands:
        if vmem_fn(tm) <= budget:
            return tm
    return 8


def _cost(m, k, n, mt, x_passes, x_isz, w_isz, o_isz):
    return pl.CostEstimate(
        flops=2 * m * k * n,
        transcendentals=0,
        bytes_accessed=int(x_passes * m * k * x_isz       # activations
                           + mt * k * n * w_isz           # weight per row tile
                           + m * n * o_isz                # output
                           + mt * n * 4 + k * 4))         # bias + mask


# ---------------------------------------------------------------------------
# Quant math (shared by the fused and standalone kernels)
# ---------------------------------------------------------------------------

def _fake_quant_rows(x, qmask, maxq):
    """Per-row asymmetric fake-quant of f32 x (tm, K).  qmask: (1, K) bool or None."""
    if qmask is None:
        row_min = jnp.min(x, axis=-1, keepdims=True)
        row_max = jnp.max(x, axis=-1, keepdims=True)
    else:
        big = jnp.float32(3.0e38)
        row_min = jnp.min(jnp.where(qmask, x, big), axis=-1, keepdims=True)
        row_max = jnp.max(jnp.where(qmask, x, -big), axis=-1, keepdims=True)
    xmin = jnp.minimum(row_min, 0.0)
    xmax = jnp.maximum(row_max, 0.0)
    degenerate = jnp.logical_and(xmin == 0.0, xmax == 0.0)
    xmin = jnp.where(degenerate, jnp.float32(-1.0), xmin)
    xmax = jnp.where(degenerate, jnp.float32(1.0), xmax)

    scale = (xmax - xmin) * jnp.float32(1.0 / maxq)        # (tm, 1), > 0
    inv_scale = 1.0 / scale                                # per-row reciprocal only
    zero = jnp.round(-xmin * inv_scale)

    # asymmetric_quantize: scale * (clamp(round(x/scale) + zero, 0, maxq) - zero)
    q = jnp.clip(jnp.round(x * inv_scale) + zero, 0.0, maxq)
    x_dq = scale * (q - zero)
    if qmask is not None:
        x_dq = jnp.where(qmask, x_dq, x)                   # FP-kept columns untouched
    return x_dq


# ---------------------------------------------------------------------------
# Kernels
# ---------------------------------------------------------------------------

def _quant_linear_kernel(*refs, maxq, n_k, tk, use_mask):
    if use_mask:
        x_ref, w_ref, b_ref, mask_ref = refs[:4]
        rest = refs[4:]
    else:
        x_ref, w_ref, b_ref = refs[:3]
        mask_ref = None
        rest = refs[3:]
    if n_k > 1:
        o_ref, xq_ref, acc_ref = rest
    else:
        o_ref, xq_ref = rest
        acc_ref = None

    j = pl.program_id(1)
    k = pl.program_id(2)

    # Compute the fake-quantized activation row-tile once per row tile and
    # cache it (weight dtype, (n_k, tm, tk)) in VMEM for all (N, K) tiles.
    # NOTE: the j/k axes MUST stay "arbitrary" because of this scratch dep.
    @pl.when(jnp.logical_and(j == 0, k == 0))
    def _():
        x = x_ref[...].astype(jnp.float32)                         # (tm, K)
        qmask = (mask_ref[...] > 0.5) if use_mask else None        # (1, K)
        x_dq = _fake_quant_rows(x, qmask, maxq).astype(xq_ref.dtype)
        for kk in range(n_k):                                      # static lane slices
            xq_ref[kk] = x_dq[:, kk * tk:(kk + 1) * tk]

    if n_k == 1:
        acc = jnp.dot(xq_ref[0], w_ref[...], preferred_element_type=jnp.float32)
        o_ref[...] = (acc + b_ref[...].astype(jnp.float32)).astype(o_ref.dtype)
    else:
        @pl.when(k == 0)
        def _():
            acc_ref[...] = jnp.zeros_like(acc_ref)

        acc_ref[...] += jnp.dot(xq_ref[k], w_ref[...],
                                preferred_element_type=jnp.float32)

        @pl.when(k == pl.num_programs(2) - 1)
        def _():
            o_ref[...] = (acc_ref[...] + b_ref[...].astype(jnp.float32)
                          ).astype(o_ref.dtype)


def _linear_kernel(*refs, n_k):
    if n_k > 1:
        x_ref, w_ref, b_ref, o_ref, acc_ref = refs
    else:
        x_ref, w_ref, b_ref, o_ref = refs
        acc_ref = None
    k = pl.program_id(2)
    xw = jnp.dot(x_ref[...].astype(w_ref.dtype), w_ref[...],
                 preferred_element_type=jnp.float32)
    if n_k == 1:
        o_ref[...] = (xw + b_ref[...].astype(jnp.float32)).astype(o_ref.dtype)
    else:
        @pl.when(k == 0)
        def _():
            acc_ref[...] = jnp.zeros_like(acc_ref)
        acc_ref[...] += xw

        @pl.when(k == pl.num_programs(2) - 1)
        def _():
            o_ref[...] = (acc_ref[...] + b_ref[...].astype(jnp.float32)
                          ).astype(o_ref.dtype)


def _quantize_kernel(*refs, maxq, use_mask):
    if use_mask:
        x_ref, mask_ref, xq_ref = refs
    else:
        x_ref, xq_ref = refs
        mask_ref = None
    x = x_ref[...].astype(jnp.float32)
    qmask = (mask_ref[...] > 0.5) if use_mask else None
    xq_ref[...] = _fake_quant_rows(x, qmask, maxq).astype(xq_ref.dtype)


# ---------------------------------------------------------------------------
# Host-side wrappers
# ---------------------------------------------------------------------------

def plain_linear(x2d, weight_t, bias_row, *, out_dtype, force_tm=None, force_tk=None):
    """x2d: (M, K); weight_t: (K, N); bias_row: (1, N) f32."""
    M, K = x2d.shape
    N = weight_t.shape[1]
    x_isz = jnp.dtype(x2d.dtype).itemsize
    w_isz = jnp.dtype(weight_t.dtype).itemsize
    o_isz = jnp.dtype(out_dtype).itemsize
    budget, vmem_limit = _vmem_config()

    tn = _pick_tn(N)
    tk = _pick_tk(K, tn, w_isz, force_tk)
    n_k = K // tk

    def vmem(tm):
        return (2 * tm * tk * x_isz + 2 * tk * tn * w_isz + 2 * tm * tn * o_isz
                + (tm * tn * 4 if n_k > 1 else 0) + 2 * tn * 4)

    tm = force_tm if force_tm is not None else _pick_tm(M, vmem, budget)
    mt, nt = _cdiv(M, tm), _cdiv(N, tn)

    scratch = [pltpu.VMEM((tm, tn), jnp.float32)] if n_k > 1 else []
    kernel = functools.partial(_linear_kernel, n_k=n_k)

    return pl.pallas_call(
        kernel,
        out_shape=jax.ShapeDtypeStruct((M, N), out_dtype),
        grid_spec=pltpu.PrefetchScalarGridSpec(
            num_scalar_prefetch=0,
            grid=(mt, nt, n_k),
            in_specs=[
                pl.BlockSpec((tm, tk), lambda i, j, k: (i, k)),
                pl.BlockSpec((tk, tn), lambda i, j, k: (k, j)),
                pl.BlockSpec((1, tn), lambda i, j, k: (0, j)),
            ],
            out_specs=pl.BlockSpec((tm, tn), lambda i, j, k: (i, j)),
            scratch_shapes=scratch),
        compiler_params=pltpu.CompilerParams(
            dimension_semantics=("parallel", "parallel", "arbitrary"),
            vmem_limit_bytes=int(vmem_limit)),
        cost_estimate=_cost(M, K, N, mt, (nt if n_k > 1 else 1), x_isz, w_isz, o_isz),
    )(x2d, weight_t, bias_row)


def quantize_activations(x2d, mask_row, *, bits, use_mask, out_dtype, force_tm=None):
    """Standalone per-token fake-quant of (M, K) activations -> out_dtype."""
    M, K = x2d.shape
    x_isz = jnp.dtype(x2d.dtype).itemsize
    o_isz = jnp.dtype(out_dtype).itemsize
    budget, vmem_limit = _vmem_config()

    def vmem(tm):
        return 2 * tm * K * (x_isz + o_isz) + 2 * K * 4

    tm = force_tm if force_tm is not None else _pick_tm(M, vmem, budget)
    mt = _cdiv(M, tm)

    kernel = functools.partial(_quantize_kernel, maxq=float(2 ** bits - 1),
                               use_mask=use_mask)
    in_specs = [pl.BlockSpec((tm, K), lambda i: (i, 0))]
    inputs = [x2d]
    if use_mask:
        in_specs.append(pl.BlockSpec((1, K), lambda i: (0, 0)))
        inputs.append(mask_row)

    return pl.pallas_call(
        kernel,
        out_shape=jax.ShapeDtypeStruct((M, K), out_dtype),
        grid_spec=pltpu.PrefetchScalarGridSpec(
            num_scalar_prefetch=0, grid=(mt,),
            in_specs=in_specs,
            out_specs=pl.BlockSpec((tm, K), lambda i: (i, 0))),
        compiler_params=pltpu.CompilerParams(
            dimension_semantics=("parallel",),
            vmem_limit_bytes=int(vmem_limit)),
    )(*inputs)


def act_quant_linear(x2d, weight_t, bias_row, mask_row, *, bits, out_dtype,
                     use_mask, force_tm=None, force_tk=None, force_split=False):
    """Fused fake-quant + Linear.  x2d: (M, K); weight_t: (K, N) bf16."""
    M, K = x2d.shape
    N = weight_t.shape[1]
    x_isz = jnp.dtype(x2d.dtype).itemsize
    w_isz = jnp.dtype(weight_t.dtype).itemsize
    o_isz = jnp.dtype(out_dtype).itemsize
    budget, vmem_limit = _vmem_config()

    tn = _pick_tn(N)
    tk = _pick_tk(K, tn, w_isz, force_tk)
    n_k = K // tk

    def vmem(tm):
        return (2 * tm * K * x_isz            # x block (double-buffered)
                + tm * K * w_isz              # xq scratch
                + 2 * tk * tn * w_isz         # weight block
                + 2 * tm * tn * o_isz         # output block
                + (tm * tn * 4 if n_k > 1 else 0)
                + 2 * (tn * 4 + K * 4))       # bias + mask

    tm = force_tm if force_tm is not None else _pick_tm(M, vmem, budget)
    mt, nt = _cdiv(M, tm), _cdiv(N, tn)

    # Small-M (decode) split path: the fused kernel's xq scratch forces the N
    # axis to be "arbitrary", so on a 2-TensorCore chip (v7x) only one core
    # would work when there is a single row tile.  Quantize standalone, then
    # run the all-parallel linear.
    if force_split or (mt == 1 and nt > 1 and _tensorcores_per_chip() > 1):
        xq = quantize_activations(x2d, mask_row, bits=bits, use_mask=use_mask,
                                  out_dtype=weight_t.dtype, force_tm=force_tm)
        return plain_linear(xq, weight_t, bias_row, out_dtype=out_dtype,
                            force_tm=force_tm, force_tk=force_tk)

    kernel = functools.partial(_quant_linear_kernel, maxq=float(2 ** bits - 1),
                               n_k=n_k, tk=tk, use_mask=use_mask)

    in_specs = [
        pl.BlockSpec((tm, K), lambda i, j, k: (i, 0)),   # activations (reused over j,k)
        pl.BlockSpec((tk, tn), lambda i, j, k: (k, j)),  # weight tile
        pl.BlockSpec((1, tn), lambda i, j, k: (0, j)),   # bias tile
    ]
    inputs = [x2d, weight_t, bias_row]
    if use_mask:
        in_specs.append(pl.BlockSpec((1, K), lambda i, j, k: (0, 0)))  # quant-col mask
        inputs.append(mask_row)

    scratch = [pltpu.VMEM((n_k, tm, tk), weight_t.dtype)]   # cached x_mixed (bf16)
    if n_k > 1:
        scratch.append(pltpu.VMEM((tm, tn), jnp.float32))   # f32 accumulator

    return pl.pallas_call(
        kernel,
        out_shape=jax.ShapeDtypeStruct((M, N), out_dtype),
        grid_spec=pltpu.PrefetchScalarGridSpec(
            num_scalar_prefetch=0,
            grid=(mt, nt, n_k),
            in_specs=in_specs,
            out_specs=pl.BlockSpec((tm, tn), lambda i, j, k: (i, j)),
            scratch_shapes=scratch),
        compiler_params=pltpu.CompilerParams(
            # j / k MUST stay "arbitrary": the xq scratch is filled at j==k==0.
            dimension_semantics=("parallel", "arbitrary", "arbitrary"),
            vmem_limit_bytes=int(vmem_limit)),
        cost_estimate=_cost(M, K, N, mt, 1, x_isz, w_isz, o_isz),
    )(*inputs)


# ---------------------------------------------------------------------------
# Module wrapper
# ---------------------------------------------------------------------------

class ActQuantWrapperPallas:
    """JAX/Pallas counterpart of ActQuantWrapper(nn.Linear(in, out))."""

    def __init__(self, in_features, out_features, key, param_dtype=jnp.bfloat16):
        k_w, k_b = jax.random.split(key)
        bound = 1.0 / (in_features ** 0.5)                # torch.nn.Linear init range
        w = jax.random.uniform(k_w, (out_features, in_features), jnp.float32, -bound, bound)
        b = jax.random.uniform(k_b, (out_features,), jnp.float32, -bound, bound)
        # Stored pre-transposed (K, N) in bf16 ONCE: no per-call transpose / upcast.
        self.weight_t = w.T.astype(param_dtype)
        self.bias_row = b.reshape(1, -1).astype(jnp.float32)
        self.in_features = in_features
        self.out_features = out_features
        self.bits = 16
        self.fp_features_num = 0
        self.quant_mask = jnp.ones((1, in_features), jnp.float32)  # 1.0 = quantize col
        # test / tuning overrides
        self.force_tm = None
        self.force_tk = None
        self.force_split = False

    def configure(self, bits):
        self.bits = bits

    def fp_features_configure(self, scales, fp_features):
        self.fp_features_num = fp_features
        mask = jnp.ones((self.in_features,), jnp.float32)
        if fp_features > 0:
            fp_idx = jnp.argsort(scales)[-fp_features:]   # torch.sort(scales)[1][-fp:]
            mask = mask.at[fp_idx].set(0.0)
        self.quant_mask = mask.reshape(1, -1)

    def __call__(self, x):
        x_dtype = x.dtype
        lead = x.shape[:-1]
        x2d = x.reshape(-1, x.shape[-1])
        if self.bits == 16:
            y2d = plain_linear(x2d, self.weight_t, self.bias_row, out_dtype=x_dtype,
                               force_tm=self.force_tm, force_tk=self.force_tk)
        else:
            use_mask = self.fp_features_num > 0
            y2d = act_quant_linear(
                x2d, self.weight_t, self.bias_row,
                self.quant_mask if use_mask else None,
                bits=self.bits, out_dtype=x_dtype, use_mask=use_mask,
                force_tm=self.force_tm, force_tk=self.force_tk,
                force_split=self.force_split)
        return y2d.reshape(*lead, self.out_features)


# ---------------------------------------------------------------------------
# Pure-JAX reference (mirror of the PyTorch forward, bf16 MXU operands)
# ---------------------------------------------------------------------------

def _reference_forward(x, weight_t, bias_row, quant_mask, bits, fp_features_num):
    x2d = x.reshape(-1, x.shape[-1]).astype(jnp.float32)
    w = weight_t.astype(jnp.float32)
    b = bias_row.astype(jnp.float32)
    if bits == 16:
        xm = x2d
    else:
        maxq = float(2 ** bits - 1)
        if fp_features_num > 0:
            qm = quant_mask.reshape(-1) > 0.5
        else:
            qm = jnp.ones((x2d.shape[-1],), bool)
        big = jnp.float32(3.0e38)
        rmin = jnp.min(jnp.where(qm[None, :], x2d, big), axis=-1, keepdims=True)
        rmax = jnp.max(jnp.where(qm[None, :], x2d, -big), axis=-1, keepdims=True)
        xmin = jnp.minimum(rmin, 0.0)
        xmax = jnp.maximum(rmax, 0.0)
        deg = (xmin == 0.0) & (xmax == 0.0)
        xmin = jnp.where(deg, -1.0, xmin)
        xmax = jnp.where(deg, 1.0, xmax)
        scale = (xmax - xmin) * jnp.float32(1.0 / maxq)
        inv_scale = 1.0 / scale
        zero = jnp.round(-xmin * inv_scale)
        q = jnp.clip(jnp.round(x2d * inv_scale) + zero, 0.0, maxq)
        xm = jnp.where(qm[None, :], scale * (q - zero), x2d)
    xm = xm.astype(weight_t.dtype).astype(jnp.float32)    # mirror kernel's bf16 operands
    y = xm @ w + b
    return y.reshape(*x.shape[:-1], -1).astype(x.dtype)


# ---------------------------------------------------------------------------
# Tests
# ---------------------------------------------------------------------------

if __name__ == "__main__":
    key = jax.random.PRNGKey(0)
    k_x, k_s, k_w = jax.random.split(key, 3)

    # batch=1 (find_params 3-D assert), seq=200 (exercises ragged row tiles),
    # hidden 256 -> 1024 (exercises the N grid axis with tn=512).
    B, S, H_IN, H_OUT = 1, 200, 256, 1024
    x = jax.random.normal(k_x, (B, S, H_IN), jnp.float32)
    act_scales = jax.random.uniform(k_s, (H_IN,), jnp.float32)

    def check(y, y_ref):
        assert y.shape == y_ref.shape
        assert jnp.allclose(y, y_ref, atol=2e-3, rtol=2e-3)

    # A) 4-bit, 16 FP-kept outlier columns; force tm=128 -> 2 row tiles
    #    (ragged second tile), fused masked kernel, nk=1.
    wr_a = ActQuantWrapperPallas(H_IN, H_OUT, k_w)
    wr_a.configure(bits=4)
    wr_a.fp_features_configure(act_scales, fp_features=16)
    wr_a.force_tm = 128
    y = jax.block_until_ready(wr_a(x))
    check(y, _reference_forward(x, wr_a.weight_t, wr_a.bias_row,
                                wr_a.quant_mask, 4, 16))

    # B) 8-bit, fp_features==0 (mask-free kernel); force tm=64, tk=128 ->
    #    4 row tiles (ragged last) and a 2-step K reduction with acc scratch.
    wr_b = ActQuantWrapperPallas(H_IN, H_OUT, k_w)
    wr_b.configure(bits=8)
    wr_b.fp_features_configure(act_scales, fp_features=0)
    wr_b.force_tm = 64
    wr_b.force_tk = 128
    y0 = jax.block_until_ready(wr_b(x))
    check(y0, _reference_forward(x, wr_b.weight_t, wr_b.bias_row,
                                 wr_b.quant_mask, 8, 0))

    # C) bits == 16 pass-through (plain tiled Linear), small M.
    x_small = x[:, :16, :]
    wr_c = ActQuantWrapperPallas(H_IN, H_OUT, k_w)
    y16 = jax.block_until_ready(wr_c(x_small))
    check(y16, _reference_forward(x_small, wr_c.weight_t, wr_c.bias_row, None, 16, 0))

    # D) forced split path (standalone quant kernel + all-parallel linear),
    #    the v7x small-M / decode configuration.
    wr_d = ActQuantWrapperPallas(H_IN, H_OUT, k_w)
    wr_d.configure(bits=4)
    wr_d.fp_features_configure(act_scales, fp_features=16)
    wr_d.force_split = True
    yd = jax.block_until_ready(wr_d(x))
    check(yd, _reference_forward(x, wr_d.weight_t, wr_d.bias_row,
                                 wr_d.quant_mask, 4, 16))

    # E) fully automatic tiling (whatever this chip's VMEM budget picks), 3-bit.
    wr_e = ActQuantWrapperPallas(H_IN, H_OUT, k_w)
    wr_e.configure(bits=3)
    wr_e.fp_features_configure(act_scales, fp_features=16)
    ye = jax.block_until_ready(wr_e(x))
    check(ye, _reference_forward(x, wr_e.weight_t, wr_e.bias_row,
                                 wr_e.quant_mask, 3, 16))

    print("KERNEL_OK")
</pallas_src>

<mosaic_0001>
module attributes {stable_mosaic.version = 11 : i64} {
  func.func @_quant_linear_kernel(%arg0: i32, %arg1: i32, %arg2: i32, %arg3: memref<128x256xf32, #tpu.memory_space<vmem>>, %arg4: memref<256x512xbf16, #tpu.memory_space<vmem>>, %arg5: memref<1x512xf32, #tpu.memory_space<vmem>>, %arg6: memref<1x256xf32, #tpu.memory_space<vmem>>, %arg7: memref<128x512xf32, #tpu.memory_space<vmem>>, %arg8: memref<1x128x256xbf16, #tpu.memory_space<vmem>>) attributes {dimension_semantics = [#tpu.dimension_semantics<parallel>, #tpu.dimension_semantics<arbitrary>, #tpu.dimension_semantics<arbitrary>], iteration_bounds = array<i64: 2, 2, 1>, scalar_prefetch = 0 : i64, scratch_operands = 1 : i64, tpu.core_type = #tpu.core_type<tc>, window_params = [{transform_indices = @transform_0, window_bounds = array<i64: 128, 256>}, {transform_indices = @transform_1, window_bounds = array<i64: 256, 512>}, {transform_indices = @transform_2, window_bounds = array<i64: 1, 512>}, {pipeline_mode = #tpu.pipeline_mode<synchronous>, transform_indices = @transform_3, window_bounds = array<i64: 1, 256>}, {transform_indices = @transform_4, window_bounds = array<i64: 128, 512>}]} {
    %c0_i32 = arith.constant 0 : i32
    %0 = arith.cmpi eq, %arg1, %c0_i32 : i32
    %c0_i32_0 = arith.constant 0 : i32
    %1 = arith.cmpi eq, %arg2, %c0_i32_0 : i32
    %2 = arith.andi %0, %1 : i1
    %3 = arith.extui %2 : i1 to i32
    %c0_i32_1 = arith.constant 0 : i32
    %4 = arith.cmpi ne, %3, %c0_i32_1 : i32
    scf.if %4 {
      %c0_10 = arith.constant 0 : index
      %c0_11 = arith.constant 0 : index
      %13 = vector.load %arg3[%c0_10, %c0_11] : memref<128x256xf32, #tpu.memory_space<vmem>>, vector<128x256xf32>
      %c0_12 = arith.constant 0 : index
      %c0_13 = arith.constant 0 : index
      %14 = vector.load %arg6[%c0_12, %c0_13] : memref<1x256xf32, #tpu.memory_space<vmem>>, vector<1x256xf32>
      %cst_14 = arith.constant 5.000000e-01 : f32
      %15 = vector.broadcast %cst_14 : f32 to vector<1x256xf32>
      %16 = arith.cmpf ogt, %14, %15 : vector<1x256xf32>
      %cst_15 = arith.constant 3.000000e+38 : f32
      %17 = vector.shape_cast %16 : vector<1x256xi1> to vector<1x256xi1>
      %18 = vector.broadcast %17 : vector<1x256xi1> to vector<128x256xi1>
      %19 = vector.broadcast %cst_15 : f32 to vector<128x256xf32>
      %20 = arith.select %18, %13, %19 : vector<128x256xi1>, vector<128x256xf32>
      %cst_16 = arith.constant dense<0x7F800000> : vector<128xf32>
      %21 = vector.multi_reduction <minimumf>, %20, %cst_16 [1] : vector<128x256xf32> to vector<128xf32>
      %22 = vector.shape_cast %21 : vector<128xf32> to vector<128x1xf32>
      %cst_17 = arith.constant 0.000000e+00 : f32
      %cst_18 = arith.constant 3.000000e+38 : f32
      %23 = arith.subf %cst_17, %cst_18 : f32
      %24 = vector.shape_cast %16 : vector<1x256xi1> to vector<1x256xi1>
      %25 = vector.broadcast %24 : vector<1x256xi1> to vector<128x256xi1>
      %26 = vector.broadcast %23 : f32 to vector<128x256xf32>
      %27 = arith.select %25, %13, %26 : vector<128x256xi1>, vector<128x256xf32>
      %cst_19 = arith.constant dense<0xFF800000> : vector<128xf32>
      %28 = vector.multi_reduction <maximumf>, %27, %cst_19 [1] : vector<128x256xf32> to vector<128xf32>
      %29 = vector.shape_cast %28 : vector<128xf32> to vector<128x1xf32>
      %cst_20 = arith.constant 0.000000e+00 : f32
      %30 = vector.broadcast %cst_20 : f32 to vector<128x1xf32>
      %31 = arith.minimumf %22, %30 : vector<128x1xf32>
      %cst_21 = arith.constant 0.000000e+00 : f32
      %32 = vector.broadcast %cst_21 : f32 to vector<128x1xf32>
      %33 = arith.maximumf %29, %32 : vector<128x1xf32>
      %cst_22 = arith.constant 0.000000e+00 : f32
      %34 = vector.broadcast %cst_22 : f32 to vector<128x1xf32>
      %35 = arith.cmpf oeq, %31, %34 : vector<128x1xf32>
      %cst_23 = arith.constant 0.000000e+00 : f32
      %36 = vector.broadcast %cst_23 : f32 to vector<128x1xf32>
      %37 = arith.cmpf oeq, %33, %36 : vector<128x1xf32>
      %38 = arith.andi %35, %37 : vector<128x1xi1>
      %cst_24 = arith.constant -1.000000e+00 : f32
      %39 = vector.broadcast %cst_24 : f32 to vector<128x1xf32>
      %40 = arith.select %38, %39, %31 : vector<128x1xi1>, vector<128x1xf32>
      %cst_25 = arith.constant 1.000000e+00 : f32
      %41 = vector.broadcast %cst_25 : f32 to vector<128x1xf32>
      %42 = arith.select %38, %41, %33 : vector<128x1xi1>, vector<128x1xf32>
      %43 = arith.subf %42, %40 : vector<128x1xf32>
      %cst_26 = arith.constant 0.0666666701 : f32
      %44 = vector.broadcast %cst_26 : f32 to vector<128x1xf32>
      %45 = arith.mulf %43, %44 : vector<128x1xf32>
      %cst_27 = arith.constant 1.000000e+00 : f32
      %46 = vector.broadcast %cst_27 : f32 to vector<128x1xf32>
      %47 = arith.divf %46, %45 : vector<128x1xf32>
      %cst_28 = arith.constant 0.000000e+00 : f32
      %48 = vector.broadcast %cst_28 : f32 to vector<128x1xf32>
      %49 = arith.subf %48, %40 : vector<128x1xf32>
      %50 = arith.mulf %49, %47 : vector<128x1xf32>
      %51 = math.roundeven %50 : vector<128x1xf32>
      %52 = vector.broadcast %47 : vector<128x1xf32> to vector<128x256xf32>
      %53 = arith.mulf %13, %52 : vector<128x256xf32>
      %54 = math.roundeven %53 : vector<128x256xf32>
      %55 = vector.broadcast %51 : vector<128x1xf32> to vector<128x256xf32>
      %56 = arith.addf %54, %55 : vector<128x256xf32>
      %cst_29 = arith.constant 0.000000e+00 : f32
      %cst_30 = arith.constant 1.500000e+01 : f32
      %57 = vector.broadcast %cst_29 : f32 to vector<128x256xf32>
      %58 = arith.maximumf %57, %56 : vector<128x256xf32>
      %59 = vector.broadcast %cst_30 : f32 to vector<128x256xf32>
      %60 = arith.minimumf %59, %58 : vector<128x256xf32>
      %61 = vector.broadcast %51 : vector<128x1xf32> to vector<128x256xf32>
      %62 = arith.subf %60, %61 : vector<128x256xf32>
      %63 = vector.broadcast %45 : vector<128x1xf32> to vector<128x256xf32>
      %64 = arith.mulf %63, %62 : vector<128x256xf32>
      %65 = vector.shape_cast %16 : vector<1x256xi1> to vector<1x256xi1>
      %66 = vector.broadcast %65 : vector<1x256xi1> to vector<128x256xi1>
      %67 = arith.select %66, %64, %13 : vector<128x256xi1>, vector<128x256xf32>
      %68 = arith.truncf %67 : vector<128x256xf32> to vector<128x256xbf16>
      %c0_31 = arith.constant 0 : index
      %c0_32 = arith.constant 0 : index
      %c0_33 = arith.constant 0 : index
      %69 = vector.load %arg8[%c0_31, %c0_32, %c0_33] : memref<1x128x256xbf16, #tpu.memory_space<vmem>>, vector<1x128x256xbf16>
      %70 = vector.shape_cast %69 : vector<1x128x256xbf16> to vector<128x256xbf16>
      %71 = vector.shape_cast %68 : vector<128x256xbf16> to vector<1x128x256xbf16>
      tpu.vector_store %arg8[%c0_31, %c0_32, %c0_33], %71 {strides = array<i32>} : memref<1x128x256xbf16, #tpu.memory_space<vmem>>, vector<1x128x256xbf16>,
    } else {
    }
    %c0 = arith.constant 0 : index
    %c0_2 = arith.constant 0 : index
    %c0_3 = arith.constant 0 : index
    %5 = vector.load %arg8[%c0, %c0_2, %c0_3] : memref<1x128x256xbf16, #tpu.memory_space<vmem>>, vector<1x128x256xbf16>
    %6 = vector.shape_cast %5 : vector<1x128x256xbf16> to vector<128x256xbf16>
    %c0_4 = arith.constant 0 : index
    %c0_5 = arith.constant 0 : index
    %7 = vector.load %arg4[%c0_4, %c0_5] : memref<256x512xbf16, #tpu.memory_space<vmem>>, vector<256x512xbf16>
    %cst = arith.constant dense<0.000000e+00> : vector<128x512xf32>
    %8 = tpu.matmul %6, %7, %cst {dimension_numbers = #tpu.dot_dimension_numbers<[1], [0], [0], [1], [0, 0, 1, 1], [], []>} : vector<128x256xbf16>, vector<256x512xbf16>, vector<128x512xf32> -> vector<128x512xf32>
    %c0_6 = arith.constant 0 : index
    %c0_7 = arith.constant 0 : index
    %9 = vector.load %arg5[%c0_6, %c0_7] : memref<1x512xf32, #tpu.memory_space<vmem>>, vector<1x512xf32>
    %10 = vector.broadcast %9 : vector<1x512xf32> to vector<128x512xf32>
    %11 = arith.addf %8, %10 : vector<128x512xf32>
    %c0_8 = arith.constant 0 : index
    %c0_9 = arith.constant 0 : index
    %12 = vector.load %arg7[%c0_8, %c0_9] : memref<128x512xf32, #tpu.memory_space<vmem>>, vector<128x512xf32>
    tpu.vector_store %arg7[%c0_8, %c0_9], %11 {strides = array<i32>} : memref<128x512xf32, #tpu.memory_space<vmem>>, vector<128x512xf32>,
    return
  }
  func.func @transform_0(%arg0: i32, %arg1: i32, %arg2: i32) -> (i32, i32) {
    %c0_i32 = arith.constant 0 : i32
    %c0_i32_0 = arith.constant 0 : i32
    return %arg0, %c0_i32 : i32, i32
  }
  func.func @transform_1(%arg0: i32, %arg1: i32, %arg2: i32) -> (i32, i32) {
    %c0_i32 = arith.constant 0 : i32
    return %arg2, %arg1 : i32, i32
  }
  func.func @transform_2(%arg0: i32, %arg1: i32, %arg2: i32) -> (i32, i32) {
    %c0_i32 = arith.constant 0 : i32
    %c0_i32_0 = arith.constant 0 : i32
    return %c0_i32, %arg1 : i32, i32
  }
  func.func @transform_3(%arg0: i32, %arg1: i32, %arg2: i32) -> (i32, i32) {
    %c0_i32 = arith.constant 0 : i32
    %c0_i32_0 = arith.constant 0 : i32
    %c0_i32_1 = arith.constant 0 : i32
    return %c0_i32, %c0_i32_0 : i32, i32
  }
  func.func @transform_4(%arg0: i32, %arg1: i32, %arg2: i32) -> (i32, i32) {
    %c0_i32 = arith.constant 0 : i32
    return %arg0, %arg1 : i32, i32
  }
}

</mosaic_0001>

<llo_original>
// kernel: tpu_custom_call.1
$region0: #{tpu_custom_call.1}
  #allocation0 [shape = 'u32[]', space=smem, size = 0x4, offset = 0x4, fixed_abs, tag = 'smem constant byte address 0x4 - core index']
  #allocation1 [shape = 'u32[144,128]{1,0:T(1,128)}', space=vmem, size = 0x12000, scoped, tag = 'internal scratch']
  #allocation2 [shape = 'bf16[1,128,256]{2,1,0:T(16,128)(2,1)}', space=vmem, size = 0x10000, scoped, tag = 'scratch operand']
  %s0 = inlined_call_operand.hbm [shape: f32[200,256], index: 0, kind: input, shape index: {}]
  %s1 = inlined_call_operand.hbm [shape: bf16[256,1024], index: 1, kind: input, shape index: {}]
  %s2 = inlined_call_operand.hbm [shape: f32[1,1024], index: 2, kind: input, shape index: {}]
  %s3 = inlined_call_operand.hbm [shape: f32[1,256], index: 3, kind: input, shape index: {}]
  %s4 = inlined_call_operand.hbm [shape: f32[200,1024], index: 4, kind: output, shape index: {}]
  %s5 = sld [smem:[#allocation0]]
  $region69: #{tpu_custom_call.1} parent=0
    _
  %s7 = ssub.s32 1, %s5
  %s8 = scalar_select 0, %s7, %s5
  $region1: #{tpu_custom_call.1} parent=0
    #allocation3 [shape = 'u8[262144]{0}', space=vmem, size = 0x40000, scoped, tag = 'input window, operand 0']
    #allocation4 [shape = 's32[2]{0}', space=sflag, size = 0x8, scoped, tag = 'scoped memory for tpu_custom_call.1']
    #allocation5 [shape = 's32[2]{0}', space=sflag, size = 0x8, scoped, tag = 'scoped memory for tpu_custom_call.1']
    #allocation6 [shape = 'u8[524288]{0}', space=vmem, size = 0x80000, scoped, tag = 'input window, operand 1']
    #allocation7 [shape = 's32[2]{0}', space=sflag, size = 0x8, scoped, tag = 'scoped memory for tpu_custom_call.1']
    #allocation8 [shape = 'u8[4096]{0}', space=vmem, size = 0x1000, scoped, tag = 'input window, operand 2']
    #allocation9 [shape = 'u8[1024]{0}', space=vmem, size = 0x400, scoped, tag = 'input window, operand 3, single buffered']
    #allocation10 [shape = 's32[1]{0}', space=sflag, size = 0x4, scoped, tag = 'scoped memory for tpu_custom_call.1']
    #allocation11 [shape = 'u8[524288]{0}', space=vmem, size = 0x80000, scoped, tag = 'output window, operand 0']
    %9 = vsyncpa [#allocation4], 0
    %s10 = scalar_lea.sflag [#allocation4], 1
    %11 = vsyncpa %s10, 0
    %12 = vsyncpa [#allocation7], 0
    %s13 = scalar_lea.sflag [#allocation7], 1
    %14 = vsyncpa %s13, 0
    %15 = vsyncpa [#allocation10], 0
    %16 = vsyncpa [#allocation5], 0
    %s17 = scalar_lea.sflag [#allocation5], 1
    %18 = vsyncpa %s17, 0
    loop: start=0, step=1, limit=6
    $region2: #{tpu_custom_call.1} parent=1 // loop_pre_header
      _
    $region3: #{tpu_custom_call.1} parent=1 // loop_header
      %s20 = sphi 0, %s24
      %p21 = scmp.ge.s32.totalorder %s20, 6
      %s27 = sphi 0, %s46
      %s28 = sphi 0, %s42
      %s29 = sphi 0, %s38
      %s30 = sphi 0, %s27
      %s31 = sphi 0, %s28
      %s32 = sphi 0, %s29
      %s33 = sphi 0, %s30
      %s34 = sphi 0, %s31
      %s35 = sphi 0, %s32
      %s49 = sphi 0, %s51
      %s52 = sphi 0, %s49
      %s53 = sphi 0, %s52
      %s69 = sphi 0, %s53
      %s77 = sphi 0, %s79
      %s80 = sphi 0, %s77
      %s81 = sphi 0, %s80
      %s97 = sphi 0, %s81
      %s103 = sphi 0, %s105
      %s106 = sphi 0, %s103
      %s107 = sphi 0, %s106
      %s123 = sphi 0, %s107
      %s127 = sphi 0, %s127
      %s129 = sphi 0, %s127
      %s130 = sphi 0, %s129
      %s144 = sphi 0, %s130
      %s152 = sphi 0, %s154
      %s155 = sphi 0, %s152
      %s156 = sphi 0, %s155
      %s172 = sphi 0, %s156
    $region4: #{tpu_custom_call.1} parent=1 // loop_header_branch
      %23 = sbr.rel (%p21) target = $region8
    $region5: #{tpu_custom_call.1} parent=1 // loop_body
      %s25 = ssub.s32 %s20, 1
      %s26 = ssub.s32 %s20, 2
      %s36 = sadd.s32 1, %s29
      %p37 = scmp.ge.s32.totalorder %s36, 1
      %s38 = scalar_select %p37, 0, %s36
      %s39 = sadd.s32 1, %s28
      %s40 = scalar_select %p37, %s39, %s28
      %p41 = scmp.ge.s32.totalorder %s40, 2
      %s42 = scalar_select %p41, 0, %s40
      %s43 = sadd.s32 1, %s27
      %s44 = scalar_select %p41, %s43, %s27
      %p45 = scmp.ge.s32.totalorder %s44, 2
      %s46 = scalar_select %p45, 0, %s44
      %s47 = ssub.s32 %s27, %s46
      %p48 = scmp.eq.s32.totalorder %s47, 0
      %s50 = sadd.s32 %s49, 1
      %s51 = scalar_select %p48, %s49, %s50
      %p54 = pneg %p48
      %p55 = scmp.eq.s32.totalorder %s20, 3
      %p56 = por %p54, %p55
      %p57 = scmp.ne.s32.totalorder %s49, %s52
      %p58 = scmp.eq.s32.totalorder %s20, 0
      %p59 = por %p57, %p58
      %p60 = scmp.ne.s32.totalorder %s49, %s52
      %p61 = scmp.eq.s32.totalorder %s25, 3
      %p62 = por %p60, %p61
      %p63 = scmp.ne.s32.totalorder %s52, %s53
      %p64 = scmp.eq.s32.totalorder %s25, 0
      %p65 = por %p63, %p64
      %p66 = scmp.ne.s32.totalorder %s52, %s53
      %p67 = scmp.eq.s32.totalorder %s26, 3
      %p68 = por %p66, %p67
      %p70 = scmp.ne.s32.totalorder %s53, %s69
      %p71 = scmp.eq.s32.totalorder %s26, 0
      %p72 = por %p70, %p71
      %s73 = ssub.s32 %s29, %s38
      %s74 = ssub.s32 %s28, %s42
      %s75 = sor.u32 %s73, %s74
      %p76 = scmp.eq.s32.totalorder %s75, 0
      %s78 = sadd.s32 %s77, 1
      %s79 = scalar_select %p76, %s77, %s78
      %p82 = pneg %p76
      %p83 = scmp.eq.s32.totalorder %s20, 3
      %p84 = por %p82, %p83
      %p85 = scmp.ne.s32.totalorder %s77, %s80
      %p86 = scmp.eq.s32.totalorder %s20, 0
      %p87 = por %p85, %p86
      %p88 = scmp.ne.s32.totalorder %s77, %s80
      %p89 = scmp.eq.s32.totalorder %s25, 3
      %p90 = por %p88, %p89
      %p91 = scmp.ne.s32.totalorder %s80, %s81
      %p92 = scmp.eq.s32.totalorder %s25, 0
      %p93 = por %p91, %p92
      %p94 = scmp.ne.s32.totalorder %s80, %s81
      %p95 = scmp.eq.s32.totalorder %s26, 3
      %p96 = por %p94, %p95
      %p98 = scmp.ne.s32.totalorder %s81, %s97
      %p99 = scmp.eq.s32.totalorder %s26, 0
      %p100 = por %p98, %p99
      %s101 = ssub.s32 %s28, %s42
      %p102 = scmp.eq.s32.totalorder %s101, 0
      %s104 = sadd.s32 %s103, 1
      %s105 = scalar_select %p102, %s103, %s104
      %p108 = pneg %p102
      %p109 = scmp.eq.s32.totalorder %s20, 3
      %p110 = por %p108, %p109
      %p111 = scmp.ne.s32.totalorder %s103, %s106
      %p112 = scmp.eq.s32.totalorder %s20, 0
      %p113 = por %p111, %p112
      %p114 = scmp.ne.s32.totalorder %s103, %s106
      %p115 = scmp.eq.s32.totalorder %s25, 3
      %p116 = por %p114, %p115
      %p117 = scmp.ne.s32.totalorder %s106, %s107
      %p118 = scmp.eq.s32.totalorder %s25, 0
      %p119 = por %p117, %p118
      %p120 = scmp.ne.s32.totalorder %s106, %s107
      %p121 = scmp.eq.s32.totalorder %s26, 3
      %p122 = por %p120, %p121
      %p124 = scmp.ne.s32.totalorder %s107, %s123
      %p125 = scmp.eq.s32.totalorder %s26, 0
      %p126 = por %p124, %p125
      %s128 = sadd.s32 %s127, 1
      %p131 = scmp.eq.s32.totalorder %s20, 3
      %p132 = scmp.ne.s32.totalorder %s127, %s129
      %p133 = scmp.eq.s32.totalorder %s20, 0
      %p134 = por %p132, %p133
      %p135 = scmp.ne.s32.totalorder %s127, %s129
      %p136 = scmp.eq.s32.totalorder %s25, 3
      %p137 = por %p135, %p136
      %p138 = scmp.ne.s32.totalorder %s129, %s130
      %p139 = scmp.eq.s32.totalorder %s25, 0
      %p140 = por %p138, %p139
      %p141 = scmp.ne.s32.totalorder %s129, %s130
      %p142 = scmp.eq.s32.totalorder %s26, 3
      %p143 = por %p141, %p142
      %p145 = scmp.ne.s32.totalorder %s130, %s144
      %p146 = scmp.eq.s32.totalorder %s26, 0
      %p147 = por %p145, %p146
      %s148 = ssub.s32 %s27, %s46
      %s149 = ssub.s32 %s28, %s42
      %s150 = sor.u32 %s148, %s149
      %p151 = scmp.eq.s32.totalorder %s150, 0
      %s153 = sadd.s32 %s152, 1
      %s154 = scalar_select %p151, %s152, %s153
      %p157 = pneg %p151
      %p158 = scmp.eq.s32.totalorder %s20, 3
      %p159 = por %p157, %p158
      %p160 = scmp.ne.s32.totalorder %s152, %s155
      %p161 = scmp.eq.s32.totalorder %s20, 0
      %p162 = por %p160, %p161
      %p163 = scmp.ne.s32.totalorder %s152, %s155
      %p164 = scmp.eq.s32.totalorder %s25, 3
      %p165 = por %p163, %p164
      %p166 = scmp.ne.s32.totalorder %s155, %s156
      %p167 = scmp.eq.s32.totalorder %s25, 0
      %p168 = por %p166, %p167
      %p169 = scmp.ne.s32.totalorder %s155, %s156
      %p170 = scmp.eq.s32.totalorder %s26, 3
      %p171 = por %p169, %p170
      %p173 = scmp.ne.s32.totalorder %s156, %s172
      %p174 = scmp.eq.s32.totalorder %s26, 0
      %p175 = por %p173, %p174
      %p176 = scmp.le.s32.totalorder 1, %s20
      %p177 = scmp.lt.s32.totalorder %s20, 5
      %p178 = pnand %p176, %p177
      %p179 = pneg %p178
      // Predicated region
      $region9: #{tpu_custom_call.1} parent=5 // pred_check
        _
      $region10: #{tpu_custom_call.1} parent=5 // pred_check_branch
        %181 = sbr.rel (%p178) target = $region12
      $region11: #{tpu_custom_call.1} parent=5 // pred_region
        %s182 = ssub.s32 %s20, 1
        // Predicated region
        $region13: #{tpu_custom_call.1} parent=11 // pred_check
          %p183 = pneg %p140
        $region14: #{tpu_custom_call.1} parent=11 // pred_check_branch
          %185 = sbr.rel (%p183) target = $region16
        $region15: #{tpu_custom_call.1} parent=11 // pred_region
          %s187 = ssub.s32 32, 32
          %188 = vsyncadd [#allocation10], %s187
          %s190 = sshll.u32 [#allocation9], 4
          %s191 = int_to_ptr.vmem [resolvable:$true] %s190
          %193 = dma.hbm_to_vmem [thread:$0]  %s3, 32, %s191, [#allocation10]
        $region16: #{tpu_custom_call.1} parent=11 // pred_fallthru
          _
      $region12: #{tpu_custom_call.1} parent=5 // pred_fallthru
        _
      %p194 = scmp.lt.s32.totalorder %s20, 4
      // Predicated region
      $region17: #{tpu_custom_call.1} parent=5 // pred_check
        %p195 = pneg %p194
      $region18: #{tpu_custom_call.1} parent=5 // pred_check_branch
        %197 = sbr.rel (%p195) target = $region20
      $region19: #{tpu_custom_call.1} parent=5 // pred_region
        // Predicated region
        $region21: #{tpu_custom_call.1} parent=19 // pred_check
          %p198 = pneg %p59
        $region22: #{tpu_custom_call.1} parent=19 // pred_check_branch
          %200 = sbr.rel (%p198) target = $region24
        $region23: #{tpu_custom_call.1} parent=19 // pred_region
          %s201 = sand.u32 %s49, 1
          %s202 = scalar_lea.sflag [#allocation4], %s201
          %s203 = sand.u32 %s49, 1
          %s204 = smul.addr %s203, 256
          %s205 = scalar_lea.vmem [#allocation3], %s204
          %s206 = smul.u32 16, %s27
          %s207 = ssub.s32 25, %s206
          %p208 = scmp.lt.s32.totalorder %s207, 16
          %s209 = scalar_select %p208, %s207, 16
          %s210 = smul.u32 128, %s209
          %s211 = smul.u32 %s210, 2
          %s213 = ssub.s32 4096, %s211
          %214 = vsyncadd %s202, %s213
          %p215 = scmp.ne.s32.totalorder 0, %s211
          %s216 = smul.addr %s206, 2
          %s217 = smul.addr %s216, 128
          %s218 = scalar_lea.hbm %s0, %s217
          %s219 = smul.u32 16, %s209
          %s220 = sshll.u32 %s205, 4
          %s221 = int_to_ptr.vmem [resolvable:$true] %s220
          %s222 = sshll.u32 %s219, 4
          %226 = dma.hbm_to_vmem [thread:$0]  (%p215), %s218, %s222, %s221, %s202, 256, 256, 16
        $region24: #{tpu_custom_call.1} parent=19 // pred_fallthru
          _
        // Predicated region
        $region25: #{tpu_custom_call.1} parent=19 // pred_check
          %p227 = pneg %p87
        $region26: #{tpu_custom_call.1} parent=19 // pred_check_branch
          %229 = sbr.rel (%p227) target = $region28
        $region27: #{tpu_custom_call.1} parent=19 // pred_region
          %s230 = sand.u32 %s20, 1
          %s231 = scalar_lea.sflag [#allocation7], %s230
          %s232 = sand.u32 %s77, 1
          %s233 = smul.addr %s232, 512
          %s234 = scalar_lea.vmem [#allocation6], %s233
          %s235 = smul.u32 32, %s29
          %s236 = smul.u32 4, %s28
          %s238 = ssub.s32 8192, 8192
          %239 = vsyncadd %s231, %s238
          %s240 = smul.addr %s235, 8
          %s241 = sadd.s32 %s236, %s240
          %s242 = smul.addr %s241, 64
          %s243 = scalar_lea.hbm %s1, %s242
          %s244 = sshll.u32 %s234, 4
          %s245 = int_to_ptr.vmem [resolvable:$true] %s244
          %250 = dma.hbm_to_vmem [thread:$0]  %s243, 8192, %s245, %s231, 512, 256, 16
        $region28: #{tpu_custom_call.1} parent=19 // pred_fallthru
          _
        // Predicated region
        $region29: #{tpu_custom_call.1} parent=19 // pred_check
          %p251 = pneg %p113
        $region30: #{tpu_custom_call.1} parent=19 // pred_check_branch
          %253 = sbr.rel (%p251) target = $region32
        $region31: #{tpu_custom_call.1} parent=19 // pred_region
          %s254 = sand.u32 %s20, 1
          %s255 = scalar_lea.sflag [#allocation7], %s254
          %s256 = sand.u32 %s103, 1
          %s257 = smul.addr %s256, 4
          %s258 = scalar_lea.vmem [#allocation8], %s257
          %s259 = smul.u32 4, %s28
          %s261 = ssub.s32 64, 64
          %262 = vsyncadd %s255, %s261
          %s263 = smul.addr %s259, 16
          %s264 = scalar_lea.hbm %s2, %s263
          %s266 = sshll.u32 %s258, 4
          %s267 = int_to_ptr.vmem [resolvable:$true] %s266
          %269 = dma.hbm_to_vmem [thread:$0]  %s264, 64, %s267, %s255
        $region32: #{tpu_custom_call.1} parent=19 // pred_fallthru
          _
      $region20: #{tpu_custom_call.1} parent=5 // pred_fallthru
        _
      %p270 = scmp.le.s32.totalorder 1, %s20
      %p271 = scmp.lt.s32.totalorder %s20, 5
      %p272 = pnand %p270, %p271
      %p273 = pneg %p272
      // Predicated region
      $region33: #{tpu_custom_call.1} parent=5 // pred_check
        _
      $region34: #{tpu_custom_call.1} parent=5 // pred_check_branch
        %275 = sbr.rel (%p272) target = $region36
      $region35: #{tpu_custom_call.1} parent=5 // pred_region
        %s276 = ssub.s32 %s20, 1
        %s277 = sand.u32 %s52, 1
        %s278 = scalar_lea.sflag [#allocation4], %s277
        %s279 = sand.u32 %s52, 1
        %s280 = smul.addr %s279, 256
        %s281 = scalar_lea.vmem [#allocation3], %s280
        // Predicated region
        $region37: #{tpu_custom_call.1} parent=35 // pred_check
          %p282 = pneg %p65
        $region38: #{tpu_custom_call.1} parent=35 // pred_check_branch
          %284 = sbr.rel (%p282) target = $region40
        $region39: #{tpu_custom_call.1} parent=35 // pred_region
          %285 = dma.done %s278, 4096
        $region40: #{tpu_custom_call.1} parent=35 // pred_fallthru
          _
        %s286 = sand.u32 %s25, 1
        %s287 = scalar_lea.sflag [#allocation7], %s286
        %s288 = sand.u32 %s80, 1
        %s289 = smul.addr %s288, 512
        %s290 = scalar_lea.vmem [#allocation6], %s289
        // Predicated region
        $region41: #{tpu_custom_call.1} parent=35 // pred_check
          %p291 = pneg %p93
        $region42: #{tpu_custom_call.1} parent=35 // pred_check_branch
          %293 = sbr.rel (%p291) target = $region44
        $region43: #{tpu_custom_call.1} parent=35 // pred_region
          %294 = dma.done %s287, 8192
        $region44: #{tpu_custom_call.1} parent=35 // pred_fallthru
          _
        %s295 = sand.u32 %s25, 1
        %s296 = scalar_lea.sflag [#allocation7], %s295
        %s297 = sand.u32 %s106, 1
        %s298 = smul.addr %s297, 4
        %s299 = scalar_lea.vmem [#allocation8], %s298
        // Predicated region
        $region45: #{tpu_custom_call.1} parent=35 // pred_check
          %p300 = pneg %p119
        $region46: #{tpu_custom_call.1} parent=35 // pred_check_branch
          %302 = sbr.rel (%p300) target = $region48
        $region47: #{tpu_custom_call.1} parent=35 // pred_region
          %303 = dma.done %s296, 64
        $region48: #{tpu_custom_call.1} parent=35 // pred_fallthru
          _
        // Predicated region
        $region49: #{tpu_custom_call.1} parent=35 // pred_check
          %p304 = pneg %p140
        $region50: #{tpu_custom_call.1} parent=35 // pred_check_branch
          %306 = sbr.rel (%p304) target = $region52
        $region51: #{tpu_custom_call.1} parent=35 // pred_region
          %307 = dma.done [#allocation10], 32
        $region52: #{tpu_custom_call.1} parent=35 // pred_fallthru
          _
        %s308 = sand.u32 %s52, 1
        %s309 = scalar_lea.sflag [#allocation4], %s308
        %s310 = sand.u32 %s52, 1
        %s311 = smul.addr %s310, 256
        %s312 = scalar_lea.vmem [#allocation3], %s311
        %p313 = pneg %p65
        %p314 = pneg %p62
        %s315 = sand.u32 %s25, 1
        %s316 = scalar_lea.sflag [#allocation7], %s315
        %s317 = sand.u32 %s80, 1
        %s318 = smul.addr %s317, 512
        %s319 = scalar_lea.vmem [#allocation6], %s318
        %p320 = pneg %p93
        %p321 = pneg %p90
        %s322 = sand.u32 %s25, 1
        %s323 = scalar_lea.sflag [#allocation7], %s322
        %s324 = sand.u32 %s106, 1
        %s325 = smul.addr %s324, 4
        %s326 = scalar_lea.vmem [#allocation8], %s325
        %p327 = pneg %p119
        %p328 = pneg %p116
        %p329 = pneg %p140
        %p330 = pneg %p137
        %p331 = pneg %p168
        %p332 = pneg %p165
        %s333 = sand.u32 %s155, 1
        %s334 = scalar_lea.sflag [#allocation5], %s333
        %s335 = sand.u32 %s155, 1
        %s336 = smul.addr %s335, 512
        %s337 = scalar_lea.vmem [#allocation11], %s336
        %s338 = smul.u32 16, %s30
        %s339 = ssub.s32 25, %s338
        %p340 = scmp.lt.s32.totalorder %s339, 16
        %s341 = scalar_select %p340, %s339, 16
        %s342 = smul.u32 128, %s341
        %s343 = smul.u32 %s342, 2
        %s344 = smul.u32 32, %s32
        %s345 = smul.u32 4, %s31
        %s346 = smul.u32 4, %s31
        %s347 = smul.u32 16, %s30
        %s348 = smul.u32 4, %s31
        %s349 = ssub.s32 25, %s347
        %p350 = scmp.lt.s32.totalorder %s349, 16
        %s351 = scalar_select %p350, %s349, 16
        %s352 = smul.u32 128, %s351
        %s353 = smul.u32 %s352, 4
        %p354 = scmp.eq.s32.totalorder %s31, 0
        %p355 = scmp.eq.s32.totalorder %s32, 0
        %p356 = pnand %p354, %p355
        %p357 = pneg %p356
        // Predicated region
        $region53: #{tpu_custom_call.1} parent=35 // pred_check
          _
        $region54: #{tpu_custom_call.1} parent=35 // pred_check_branch
          %359 = sbr.rel (%p356) target = $region56
        $region55: #{tpu_custom_call.1} parent=35 // pred_region
          %v360 = vld [vmem:[%s281] sm:$0xff]
          %v361 = vld [vmem:[%s281 + $0x8] sm:$0xff]
          %v362 = vld [vmem:[%s281 + $0x10] sm:$0xff]
          %v363 = vld [vmem:[%s281 + $0x18] sm:$0xff]
          %v364 = vld [vmem:[%s281 + $0x20] sm:$0xff]
          %v365 = vld [vmem:[%s281 + $0x28] sm:$0xff]
          %v366 = vld [vmem:[%s281 + $0x30] sm:$0xff]
          %v367 = vld [vmem:[%s281 + $0x38] sm:$0xff]
          %v368 = vld [vmem:[%s281 + $0x40] sm:$0xff]
          %v369 = vld [vmem:[%s281 + $0x48] sm:$0xff]
          %v370 = vld [vmem:[%s281 + $0x50] sm:$0xff]
          %v371 = vld [vmem:[%s281 + $0x58] sm:$0xff]
          %v372 = vld [vmem:[%s281 + $0x60] sm:$0xff]
          %v373 = vld [vmem:[%s281 + $0x68] sm:$0xff]
          %v374 = vld [vmem:[%s281 + $0x70] sm:$0xff]
          %v375 = vld [vmem:[%s281 + $0x78] sm:$0xff]
          %v376 = vld [vmem:[%s281 + $0x80] sm:$0xff]
          %v377 = vld [vmem:[%s281 + $0x88] sm:$0xff]
          %v378 = vld [vmem:[%s281 + $0x90] sm:$0xff]
          %v379 = vld [vmem:[%s281 + $0x98] sm:$0xff]
          %v380 = vld [vmem:[%s281 + $0xa0] sm:$0xff]
          %v381 = vld [vmem:[%s281 + $0xa8] sm:$0xff]
          %v382 = vld [vmem:[%s281 + $0xb0] sm:$0xff]
          %v383 = vld [vmem:[%s281 + $0xb8] sm:$0xff]
          %v384 = vld [vmem:[%s281 + $0xc0] sm:$0xff]
          %v385 = vld [vmem:[%s281 + $0xc8] sm:$0xff]
          %v386 = vld [vmem:[%s281 + $0xd0] sm:$0xff]
          %v387 = vld [vmem:[%s281 + $0xd8] sm:$0xff]
          %v388 = vld [vmem:[%s281 + $0xe0] sm:$0xff]
          %v389 = vld [vmem:[%s281 + $0xe8] sm:$0xff]
          %v390 = vld [vmem:[%s281 + $0xf0] sm:$0xff]
          %v391 = vld [vmem:[%s281 + $0xf8] sm:$0xff]
          %v392 = vld [vmem:[#allocation9] sm:$0x3]
          %vm393 = vcmp.gt.f32.partialorder %v392, 0.5
          %v394 = vsel %vm393, 1, 0
          %v395 = vlaneseq
          %v396 = vshrl.u32 %v395, 7
          %v397 = vsub.s32 0, %v396
          %v398 = vrot.slane %v394, %v397
          %v399 = vlaneseq
          %v400 = vshrl.u32 %v399, 7
          %v401 = vsub.s32 1, %v400
          %v402 = vrot.slane %v394, %v401
          %vm403 = vcmp.eq.s32.totalorder %v398, 1
          %vm404 = vcmp.eq.s32.totalorder %v402, 1
          %v405 = vsel %vm403, %v360, 3e+38
          %v406 = vsel %vm404, %v361, 3e+38
          %v407 = vsel %vm403, %v362, 3e+38
          %v408 = vsel %vm404, %v363, 3e+38
          %v409 = vsel %vm403, %v364, 3e+38
          %v410 = vsel %vm404, %v365, 3e+38
          %v411 = vsel %vm403, %v366, 3e+38
          %v412 = vsel %vm404, %v367, 3e+38
          %v413 = vsel %vm403, %v368, 3e+38
          %v414 = vsel %vm404, %v369, 3e+38
          %v415 = vsel %vm403, %v370, 3e+38
          %v416 = vsel %vm404, %v371, 3e+38
          %v417 = vsel %vm403, %v372, 3e+38
          %v418 = vsel %vm404, %v373, 3e+38
          %v419 = vsel %vm403, %v374, 3e+38
          %v420 = vsel %vm404, %v375, 3e+38
          %v421 = vsel %vm403, %v376, 3e+38
          %v422 = vsel %vm404, %v377, 3e+38
          %v423 = vsel %vm403, %v378, 3e+38
          %v424 = vsel %vm404, %v379, 3e+38
          %v425 = vsel %vm403, %v380, 3e+38
          %v426 = vsel %vm404, %v381, 3e+38
          %v427 = vsel %vm403, %v382, 3e+38
          %v428 = vsel %vm404, %v383, 3e+38
          %v429 = vsel %vm403, %v384, 3e+38
          %v430 = vsel %vm404, %v385, 3e+38
          %v431 = vsel %vm403, %v386, 3e+38
          %v432 = vsel %vm404, %v387, 3e+38
          %v433 = vsel %vm403, %v388, 3e+38
          %v434 = vsel %vm404, %v389, 3e+38
          %v435 = vsel %vm403, %v390, 3e+38
          %v436 = vsel %vm404, %v391, 3e+38
          %v437 = vmin.f32 %v405, %v406
          %438 = vmin.xlane.f32.xlu0 %v437
          %v439 = vpop.xlane.xlu0 %438
          %v440 = vmin.f32 %v407, %v408
          %441 = vmin.xlane.f32.xlu0 %v440
          %v442 = vpop.xlane.xlu0 %441
          %v443 = vmin.f32 %v409, %v410
          %444 = vmin.xlane.f32.xlu0 %v443
          %v445 = vpop.xlane.xlu0 %444
          %v446 = vmin.f32 %v411, %v412
          %447 = vmin.xlane.f32.xlu0 %v446
          %v448 = vpop.xlane.xlu0 %447
          %v449 = vmin.f32 %v413, %v414
          %450 = vmin.xlane.f32.xlu0 %v449
          %v451 = vpop.xlane.xlu0 %450
          %v452 = vmin.f32 %v415, %v416
          %453 = vmin.xlane.f32.xlu0 %v452
          %v454 = vpop.xlane.xlu0 %453
          %v455 = vmin.f32 %v417, %v418
          %456 = vmin.xlane.f32.xlu0 %v455
          %v457 = vpop.xlane.xlu0 %456
          %v458 = vmin.f32 %v419, %v420
          %459 = vmin.xlane.f32.xlu0 %v458
          %v460 = vpop.xlane.xlu0 %459
          %v461 = vmin.f32 %v421, %v422
          %462 = vmin.xlane.f32.xlu0 %v461
          %v463 = vpop.xlane.xlu0 %462
          %v464 = vmin.f32 %v423, %v424
          %465 = vmin.xlane.f32.xlu0 %v464
          %v466 = vpop.xlane.xlu0 %465
          %v467 = vmin.f32 %v425, %v426
          %468 = vmin.xlane.f32.xlu0 %v467
          %v469 = vpop.xlane.xlu0 %468
          %v470 = vmin.f32 %v427, %v428
          %471 = vmin.xlane.f32.xlu0 %v470
          %v472 = vpop.xlane.xlu0 %471
          %v473 = vmin.f32 %v429, %v430
          %474 = vmin.xlane.f32.xlu0 %v473
          %v475 = vpop.xlane.xlu0 %474
          %v476 = vmin.f32 %v431, %v432
          %477 = vmin.xlane.f32.xlu0 %v476
          %v478 = vpop.xlane.xlu0 %477
          %v479 = vmin.f32 %v433, %v434
          %480 = vmin.xlane.f32.xlu0 %v479
          %v481 = vpop.xlane.xlu0 %480
          %v482 = vmin.f32 %v435, %v436
          %483 = vmin.xlane.f32.xlu0 %v482
          %v484 = vpop.xlane.xlu0 %483
          %v485 = vsel %vm403, %v360, -3e+38
          %v486 = vsel %vm404, %v361, -3e+38
          %v487 = vsel %vm403, %v362, -3e+38
          %v488 = vsel %vm404, %v363, -3e+38
          %v489 = vsel %vm403, %v364, -3e+38
          %v490 = vsel %vm404, %v365, -3e+38
          %v491 = vsel %vm403, %v366, -3e+38
          %v492 = vsel %vm404, %v367, -3e+38
          %v493 = vsel %vm403, %v368, -3e+38
          %v494 = vsel %vm404, %v369, -3e+38
          %v495 = vsel %vm403, %v370, -3e+38
          %v496 = vsel %vm404, %v371, -3e+38
          %v497 = vsel %vm403, %v372, -3e+38
          %v498 = vsel %vm404, %v373, -3e+38
          %v499 = vsel %vm403, %v374, -3e+38
          %v500 = vsel %vm404, %v375, -3e+38
          %v501 = vsel %vm403, %v376, -3e+38
          %v502 = vsel %vm404, %v377, -3e+38
          %v503 = vsel %vm403, %v378, -3e+38
          %v504 = vsel %vm404, %v379, -3e+38
          %v505 = vsel %vm403, %v380, -3e+38
          %v506 = vsel %vm404, %v381, -3e+38
          %v507 = vsel %vm403, %v382, -3e+38
          %v508 = vsel %vm404, %v383, -3e+38
          %v509 = vsel %vm403, %v384, -3e+38
          %v510 = vsel %vm404, %v385, -3e+38
          %v511 = vsel %vm403, %v386, -3e+38
          %v512 = vsel %vm404, %v387, -3e+38
          %v513 = vsel %vm403, %v388, -3e+38
          %v514 = vsel %vm404, %v389, -3e+38
          %v515 = vsel %vm403, %v390, -3e+38
          %v516 = vsel %vm404, %v391, -3e+38
          %v517 = vmax.f32 %v485, %v486
          %518 = vmax.xlane.f32.xlu0 %v517
          %v519 = vpop.xlane.xlu0 %518
          %v520 = vmax.f32 %v487, %v488
          %521 = vmax.xlane.f32.xlu0 %v520
          %v522 = vpop.xlane.xlu0 %521
          %v523 = vmax.f32 %v489, %v490
          %524 = vmax.xlane.f32.xlu0 %v523
          %v525 = vpop.xlane.xlu0 %524
          %v526 = vmax.f32 %v491, %v492
          %527 = vmax.xlane.f32.xlu0 %v526
          %v528 = vpop.xlane.xlu0 %527
          %v529 = vmax.f32 %v493, %v494
          %530 = vmax.xlane.f32.xlu0 %v529
          %v531 = vpop.xlane.xlu0 %530
          %v532 = vmax.f32 %v495, %v496
          %533 = vmax.xlane.f32.xlu0 %v532
          %v534 = vpop.xlane.xlu0 %533
          %v535 = vmax.f32 %v497, %v498
          %536 = vmax.xlane.f32.xlu0 %v535
          %v537 = vpop.xlane.xlu0 %536
          %v538 = vmax.f32 %v499, %v500
          %539 = vmax.xlane.f32.xlu0 %v538
          %v540 = vpop.xlane.xlu0 %539
          %v541 = vmax.f32 %v501, %v502
          %542 = vmax.xlane.f32.xlu0 %v541
          %v543 = vpop.xlane.xlu0 %542
          %v544 = vmax.f32 %v503, %v504
          %545 = vmax.xlane.f32.xlu0 %v544
          %v546 = vpop.xlane.xlu0 %545
          %v547 = vmax.f32 %v505, %v506
          %548 = vmax.xlane.f32.xlu0 %v547
          %v549 = vpop.xlane.xlu0 %548
          %v550 = vmax.f32 %v507, %v508
          %551 = vmax.xlane.f32.xlu0 %v550
          %v552 = vpop.xlane.xlu0 %551
          %v553 = vmax.f32 %v509, %v510
          %554 = vmax.xlane.f32.xlu0 %v553
          %v555 = vpop.xlane.xlu0 %554
          %v556 = vmax.f32 %v511, %v512
          %557 = vmax.xlane.f32.xlu0 %v556
          %v558 = vpop.xlane.xlu0 %557
          %v559 = vmax.f32 %v513, %v514
          %560 = vmax.xlane.f32.xlu0 %v559
          %v561 = vpop.xlane.xlu0 %560
          %v562 = vmax.f32 %v515, %v516
          %563 = vmax.xlane.f32.xlu0 %v562
          %v564 = vpop.xlane.xlu0 %563
          %v565 = vmin.f32 %v439, 0.0
          %v566 = vmin.f32 %v442, 0.0
          %v567 = vmin.f32 %v445, 0.0
          %v568 = vmin.f32 %v448, 0.0
          %v569 = vmin.f32 %v451, 0.0
          %v570 = vmin.f32 %v454, 0.0
          %v571 = vmin.f32 %v457, 0.0
          %v572 = vmin.f32 %v460, 0.0
          %v573 = vmin.f32 %v463, 0.0
          %v574 = vmin.f32 %v466, 0.0
          %v575 = vmin.f32 %v469, 0.0
          %v576 = vmin.f32 %v472, 0.0
          %v577 = vmin.f32 %v475, 0.0
          %v578 = vmin.f32 %v478, 0.0
          %v579 = vmin.f32 %v481, 0.0
          %v580 = vmin.f32 %v484, 0.0
          %v581 = vmax.f32 %v519, 0.0
          %v582 = vmax.f32 %v522, 0.0
          %v583 = vmax.f32 %v525, 0.0
          %v584 = vmax.f32 %v528, 0.0
          %v585 = vmax.f32 %v531, 0.0
          %v586 = vmax.f32 %v534, 0.0
          %v587 = vmax.f32 %v537, 0.0
          %v588 = vmax.f32 %v540, 0.0
          %v589 = vmax.f32 %v543, 0.0
          %v590 = vmax.f32 %v546, 0.0
          %v591 = vmax.f32 %v549, 0.0
          %v592 = vmax.f32 %v552, 0.0
          %v593 = vmax.f32 %v555, 0.0
          %v594 = vmax.f32 %v558, 0.0
          %v595 = vmax.f32 %v561, 0.0
          %v596 = vmax.f32 %v564, 0.0
          %vm597 = vcmp.eq.f32.partialorder %v565, 0.0
          %vm598 = vcmp.eq.f32.partialorder %v566, 0.0
          %vm599 = vcmp.eq.f32.partialorder %v567, 0.0
          %vm600 = vcmp.eq.f32.partialorder %v568, 0.0
          %vm601 = vcmp.eq.f32.partialorder %v569, 0.0
          %vm602 = vcmp.eq.f32.partialorder %v570, 0.0
          %vm603 = vcmp.eq.f32.partialorder %v571, 0.0
          %vm604 = vcmp.eq.f32.partialorder %v572, 0.0
          %vm605 = vcmp.eq.f32.partialorder %v573, 0.0
          %vm606 = vcmp.eq.f32.partialorder %v574, 0.0
          %vm607 = vcmp.eq.f32.partialorder %v575, 0.0
          %vm608 = vcmp.eq.f32.partialorder %v576, 0.0
          %vm609 = vcmp.eq.f32.partialorder %v577, 0.0
          %vm610 = vcmp.eq.f32.partialorder %v578, 0.0
          %vm611 = vcmp.eq.f32.partialorder %v579, 0.0
          %vm612 = vcmp.eq.f32.partialorder %v580, 0.0
          %vm613 = vcmp.eq.f32.partialorder %v581, 0.0
          %vm614 = vcmp.eq.f32.partialorder %v582, 0.0
          %vm615 = vcmp.eq.f32.partialorder %v583, 0.0
          %vm616 = vcmp.eq.f32.partialorder %v584, 0.0
          %vm617 = vcmp.eq.f32.partialorder %v585, 0.0
          %vm618 = vcmp.eq.f32.partialorder %v586, 0.0
          %vm619 = vcmp.eq.f32.partialorder %v587, 0.0
          %vm620 = vcmp.eq.f32.partialorder %v588, 0.0
          %vm621 = vcmp.eq.f32.partialorder %v589, 0.0
          %vm622 = vcmp.eq.f32.partialorder %v590, 0.0
          %vm623 = vcmp.eq.f32.partialorder %v591, 0.0
          %vm624 = vcmp.eq.f32.partialorder %v592, 0.0
          %vm625 = vcmp.eq.f32.partialorder %v593, 0.0
          %vm626 = vcmp.eq.f32.partialorder %v594, 0.0
          %vm627 = vcmp.eq.f32.partialorder %v595, 0.0
          %vm628 = vcmp.eq.f32.partialorder %v596, 0.0
          %vm629 = vmand %vm597, %vm613
          %vm630 = vmand %vm598, %vm614
          %vm631 = vmand %vm599, %vm615
          %vm632 = vmand %vm600, %vm616
          %vm633 = vmand %vm601, %vm617
          %vm634 = vmand %vm602, %vm618
          %vm635 = vmand %vm603, %vm619
          %vm636 = vmand %vm604, %vm620
          %vm637 = vmand %vm605, %vm621
          %vm638 = vmand %vm606, %vm622
          %vm639 = vmand %vm607, %vm623
          %vm640 = vmand %vm608, %vm624
          %vm641 = vmand %vm609, %vm625
          %vm642 = vmand %vm610, %vm626
          %vm643 = vmand %vm611, %vm627
          %vm644 = vmand %vm612, %vm628
          %v645 = vsel %vm629, -1.0, %v565
          %v646 = vsel %vm630, -1.0, %v566
          %v647 = vsel %vm631, -1.0, %v567
          %v648 = vsel %vm632, -1.0, %v568
          %v649 = vsel %vm633, -1.0, %v569
          %v650 = vsel %vm634, -1.0, %v570
          %v651 = vsel %vm635, -1.0, %v571
          %v652 = vsel %vm636, -1.0, %v572
          %v653 = vsel %vm637, -1.0, %v573
          %v654 = vsel %vm638, -1.0, %v574
          %v655 = vsel %vm639, -1.0, %v575
          %v656 = vsel %vm640, -1.0, %v576
          %v657 = vsel %vm641, -1.0, %v577
          %v658 = vsel %vm642, -1.0, %v578
          %v659 = vsel %vm643, -1.0, %v579
          %v660 = vsel %vm644, -1.0, %v580
          %v661 = vsel %vm629, 1.0, %v581
          %v662 = vsel %vm630, 1.0, %v582
          %v663 = vsel %vm631, 1.0, %v583
          %v664 = vsel %vm632, 1.0, %v584
          %v665 = vsel %vm633, 1.0, %v585
          %v666 = vsel %vm634, 1.0, %v586
          %v667 = vsel %vm635, 1.0, %v587
          %v668 = vsel %vm636, 1.0, %v588
          %v669 = vsel %vm637, 1.0, %v589
          %v670 = vsel %vm638, 1.0, %v590
          %v671 = vsel %vm639, 1.0, %v591
          %v672 = vsel %vm640, 1.0, %v592
          %v673 = vsel %vm641, 1.0, %v593
          %v674 = vsel %vm642, 1.0, %v594
          %v675 = vsel %vm643, 1.0, %v595
          %v676 = vsel %vm644, 1.0, %v596
          %v677 = vsub.f32 %v661, %v645
          %v678 = vsub.f32 %v662, %v646
          %v679 = vsub.f32 %v663, %v647
          %v680 = vsub.f32 %v664, %v648
          %v681 = vsub.f32 %v665, %v649
          %v682 = vsub.f32 %v666, %v650
          %v683 = vsub.f32 %v667, %v651
          %v684 = vsub.f32 %v668, %v652
          %v685 = vsub.f32 %v669, %v653
          %v686 = vsub.f32 %v670, %v654
          %v687 = vsub.f32 %v671, %v655
          %v688 = vsub.f32 %v672, %v656
          %v689 = vsub.f32 %v673, %v657
          %v690 = vsub.f32 %v674, %v658
          %v691 = vsub.f32 %v675, %v659
          %v692 = vsub.f32 %v676, %v660
          %v693 = vmul.f32 %v677, 0.06666667
          %v694 = vmul.f32 %v678, 0.06666667
          %v695 = vmul.f32 %v679, 0.06666667
          %v696 = vmul.f32 %v680, 0.06666667
          %v697 = vmul.f32 %v681, 0.06666667
          %v698 = vmul.f32 %v682, 0.06666667
          %v699 = vmul.f32 %v683, 0.06666667
          %v700 = vmul.f32 %v684, 0.06666667
          %v701 = vmul.f32 %v685, 0.06666667
          %v702 = vmul.f32 %v686, 0.06666667
          %v703 = vmul.f32 %v687, 0.06666667
          %v704 = vmul.f32 %v688, 0.06666667
          %v705 = vmul.f32 %v689, 0.06666667
          %v706 = vmul.f32 %v690, 0.06666667
          %v707 = vmul.f32 %v691, 0.06666667
          %v708 = vmul.f32 %v692, 0.06666667
          %v709 = vrcp.pop %v693
          %v710 = vmul.f32 1.0, %v709
          %v711 = vrcp.pop %v694
          %v712 = vmul.f32 1.0, %v711
          %v713 = vrcp.pop %v695
          %v714 = vmul.f32 1.0, %v713
          %v715 = vrcp.pop %v696
          %v716 = vmul.f32 1.0, %v715
          %v717 = vrcp.pop %v697
          %v718 = vmul.f32 1.0, %v717
          %v719 = vrcp.pop %v698
          %v720 = vmul.f32 1.0, %v719
          %v721 = vrcp.pop %v699
          %v722 = vmul.f32 1.0, %v721
          %v723 = vrcp.pop %v700
          %v724 = vmul.f32 1.0, %v723
          %v725 = vrcp.pop %v701
          %v726 = vmul.f32 1.0, %v725
          %v727 = vrcp.pop %v702
          %v728 = vmul.f32 1.0, %v727
          %v729 = vrcp.pop %v703
          %v730 = vmul.f32 1.0, %v729
          %v731 = vrcp.pop %v704
          %v732 = vmul.f32 1.0, %v731
          %v733 = vrcp.pop %v705
          %v734 = vmul.f32 1.0, %v733
          %v735 = vrcp.pop %v706
          %v736 = vmul.f32 1.0, %v735
          %v737 = vrcp.pop %v707
          %v738 = vmul.f32 1.0, %v737
          %v739 = vrcp.pop %v708
          %v740 = vmul.f32 1.0, %v739
          %v741 = vsub.f32 0.0, %v645
          %v742 = vsub.f32 0.0, %v646
          %v743 = vsub.f32 0.0, %v647
          %v744 = vsub.f32 0.0, %v648
          %v745 = vsub.f32 0.0, %v649
          %v746 = vsub.f32 0.0, %v650
          %v747 = vsub.f32 0.0, %v651
          %v748 = vsub.f32 0.0, %v652
          %v749 = vsub.f32 0.0, %v653
          %v750 = vsub.f32 0.0, %v654
          %v751 = vsub.f32 0.0, %v655
          %v752 = vsub.f32 0.0, %v656
          %v753 = vsub.f32 0.0, %v657
          %v754 = vsub.f32 0.0, %v658
          %v755 = vsub.f32 0.0, %v659
          %v756 = vsub.f32 0.0, %v660
          %v757 = vmul.f32 %v741, %v710
          %v758 = vmul.f32 %v742, %v712
          %v759 = vmul.f32 %v743, %v714
          %v760 = vmul.f32 %v744, %v716
          %v761 = vmul.f32 %v745, %v718
          %v762 = vmul.f32 %v746, %v720
          %v763 = vmul.f32 %v747, %v722
          %v764 = vmul.f32 %v748, %v724
          %v765 = vmul.f32 %v749, %v726
          %v766 = vmul.f32 %v750, %v728
          %v767 = vmul.f32 %v751, %v730
          %v768 = vmul.f32 %v752, %v732
          %v769 = vmul.f32 %v753, %v734
          %v770 = vmul.f32 %v754, %v736
          %v771 = vmul.f32 %v755, %v738
          %v772 = vmul.f32 %v756, %v740
          %v773 = vround.ne.pseudo %v757
          %v774 = vround.ne.pseudo %v758
          %v775 = vround.ne.pseudo %v759
          %v776 = vround.ne.pseudo %v760
          %v777 = vround.ne.pseudo %v761
          %v778 = vround.ne.pseudo %v762
          %v779 = vround.ne.pseudo %v763
          %v780 = vround.ne.pseudo %v764
          %v781 = vround.ne.pseudo %v765
          %v782 = vround.ne.pseudo %v766
          %v783 = vround.ne.pseudo %v767
          %v784 = vround.ne.pseudo %v768
          %v785 = vround.ne.pseudo %v769
          %v786 = vround.ne.pseudo %v770
          %v787 = vround.ne.pseudo %v771
          %v788 = vround.ne.pseudo %v772
          %v789 = vmul.f32 %v360, %v710
          %v790 = vmul.f32 %v361, %v710
          %v791 = vmul.f32 %v362, %v712
          %v792 = vmul.f32 %v363, %v712
          %v793 = vmul.f32 %v364, %v714
          %v794 = vmul.f32 %v365, %v714
          %v795 = vmul.f32 %v366, %v716
          %v796 = vmul.f32 %v367, %v716
          %v797 = vmul.f32 %v368, %v718
          %v798 = vmul.f32 %v369, %v718
          %v799 = vmul.f32 %v370, %v720
          %v800 = vmul.f32 %v371, %v720
          %v801 = vmul.f32 %v372, %v722
          %v802 = vmul.f32 %v373, %v722
          %v803 = vmul.f32 %v374, %v724
          %v804 = vmul.f32 %v375, %v724
          %v805 = vmul.f32 %v376, %v726
          %v806 = vmul.f32 %v377, %v726
          %v807 = vmul.f32 %v378, %v728
          %v808 = vmul.f32 %v379, %v728
          %v809 = vmul.f32 %v380, %v730
          %v810 = vmul.f32 %v381, %v730
          %v811 = vmul.f32 %v382, %v732
          %v812 = vmul.f32 %v383, %v732
          %v813 = vmul.f32 %v384, %v734
          %v814 = vmul.f32 %v385, %v734
          %v815 = vmul.f32 %v386, %v736
          %v816 = vmul.f32 %v387, %v736
          %v817 = vmul.f32 %v388, %v738
          %v818 = vmul.f32 %v389, %v738
          %v819 = vmul.f32 %v390, %v740
          %v820 = vmul.f32 %v391, %v740
          %v821 = vround.ne.pseudo %v789
          %v822 = vround.ne.pseudo %v790
          %v823 = vround.ne.pseudo %v791
          %v824 = vround.ne.pseudo %v792
          %v825 = vround.ne.pseudo %v793
          %v826 = vround.ne.pseudo %v794
          %v827 = vround.ne.pseudo %v795
          %v828 = vround.ne.pseudo %v796
          %v829 = vround.ne.pseudo %v797
          %v830 = vround.ne.pseudo %v798
          %v831 = vround.ne.pseudo %v799
          %v832 = vround.ne.pseudo %v800
          %v833 = vround.ne.pseudo %v801
          %v834 = vround.ne.pseudo %v802
          %v835 = vround.ne.pseudo %v803
          %v836 = vround.ne.pseudo %v804
          %v837 = vround.ne.pseudo %v805
          %v838 = vround.ne.pseudo %v806
          %v839 = vround.ne.pseudo %v807
          %v840 = vround.ne.pseudo %v808
          %v841 = vround.ne.pseudo %v809
          %v842 = vround.ne.pseudo %v810
          %v843 = vround.ne.pseudo %v811
          %v844 = vround.ne.pseudo %v812
          %v845 = vround.ne.pseudo %v813
          %v846 = vround.ne.pseudo %v814
          %v847 = vround.ne.pseudo %v815
          %v848 = vround.ne.pseudo %v816
          %v849 = vround.ne.pseudo %v817
          %v850 = vround.ne.pseudo %v818
          %v851 = vround.ne.pseudo %v819
          %v852 = vround.ne.pseudo %v820
          %v853 = vadd.f32 %v821, %v773
          %v854 = vadd.f32 %v822, %v773
          %v855 = vadd.f32 %v823, %v774
          %v856 = vadd.f32 %v824, %v774
          %v857 = vadd.f32 %v825, %v775
          %v858 = vadd.f32 %v826, %v775
          %v859 = vadd.f32 %v827, %v776
          %v860 = vadd.f32 %v828, %v776
          %v861 = vadd.f32 %v829, %v777
          %v862 = vadd.f32 %v830, %v777
          %v863 = vadd.f32 %v831, %v778
          %v864 = vadd.f32 %v832, %v778
          %v865 = vadd.f32 %v833, %v779
          %v866 = vadd.f32 %v834, %v779
          %v867 = vadd.f32 %v835, %v780
          %v868 = vadd.f32 %v836, %v780
          %v869 = vadd.f32 %v837, %v781
          %v870 = vadd.f32 %v838, %v781
          %v871 = vadd.f32 %v839, %v782
          %v872 = vadd.f32 %v840, %v782
          %v873 = vadd.f32 %v841, %v783
          %v874 = vadd.f32 %v842, %v783
          %v875 = vadd.f32 %v843, %v784
          %v876 = vadd.f32 %v844, %v784
          %v877 = vadd.f32 %v845, %v785
          %v878 = vadd.f32 %v846, %v785
          %v879 = vadd.f32 %v847, %v786
          %v880 = vadd.f32 %v848, %v786
          %v881 = vadd.f32 %v849, %v787
          %v882 = vadd.f32 %v850, %v787
          %v883 = vadd.f32 %v851, %v788
          %v884 = vadd.f32 %v852, %v788
          %v885 = vmax.f32 %v853, 0.0
          %v886 = vmax.f32 %v854, 0.0
          %v887 = vmax.f32 %v855, 0.0
          %v888 = vmax.f32 %v856, 0.0
          %v889 = vmax.f32 %v857, 0.0
          %v890 = vmax.f32 %v858, 0.0
          %v891 = vmax.f32 %v859, 0.0
          %v892 = vmax.f32 %v860, 0.0
          %v893 = vmax.f32 %v861, 0.0
          %v894 = vmax.f32 %v862, 0.0
          %v895 = vmax.f32 %v863, 0.0
          %v896 = vmax.f32 %v864, 0.0
          %v897 = vmax.f32 %v865, 0.0
          %v898 = vmax.f32 %v866, 0.0
          %v899 = vmax.f32 %v867, 0.0
          %v900 = vmax.f32 %v868, 0.0
          %v901 = vmax.f32 %v869, 0.0
          %v902 = vmax.f32 %v870, 0.0
          %v903 = vmax.f32 %v871, 0.0
          %v904 = vmax.f32 %v872, 0.0
          %v905 = vmax.f32 %v873, 0.0
          %v906 = vmax.f32 %v874, 0.0
          %v907 = vmax.f32 %v875, 0.0
          %v908 = vmax.f32 %v876, 0.0
          %v909 = vmax.f32 %v877, 0.0
          %v910 = vmax.f32 %v878, 0.0
          %v911 = vmax.f32 %v879, 0.0
          %v912 = vmax.f32 %v880, 0.0
          %v913 = vmax.f32 %v881, 0.0
          %v914 = vmax.f32 %v882, 0.0
          %v915 = vmax.f32 %v883, 0.0
          %v916 = vmax.f32 %v884, 0.0
          %v917 = vmin.f32 %v885, 15.0
          %v918 = vmin.f32 %v886, 15.0
          %v919 = vmin.f32 %v887, 15.0
          %v920 = vmin.f32 %v888, 15.0
          %v921 = vmin.f32 %v889, 15.0
          %v922 = vmin.f32 %v890, 15.0
          %v923 = vmin.f32 %v891, 15.0
          %v924 = vmin.f32 %v892, 15.0
          %v925 = vmin.f32 %v893, 15.0
          %v926 = vmin.f32 %v894, 15.0
          %v927 = vmin.f32 %v895, 15.0
          %v928 = vmin.f32 %v896, 15.0
          %v929 = vmin.f32 %v897, 15.0
          %v930 = vmin.f32 %v898, 15.0
          %v931 = vmin.f32 %v899, 15.0
          %v932 = vmin.f32 %v900, 15.0
          %v933 = vmin.f32 %v901, 15.0
          %v934 = vmin.f32 %v902, 15.0
          %v935 = vmin.f32 %v903, 15.0
          %v936 = vmin.f32 %v904, 15.0
          %v937 = vmin.f32 %v905, 15.0
          %v938 = vmin.f32 %v906, 15.0
          %v939 = vmin.f32 %v907, 15.0
          %v940 = vmin.f32 %v908, 15.0
          %v941 = vmin.f32 %v909, 15.0
          %v942 = vmin.f32 %v910, 15.0
          %v943 = vmin.f32 %v911, 15.0
          %v944 = vmin.f32 %v912, 15.0
          %v945 = vmin.f32 %v913, 15.0
          %v946 = vmin.f32 %v914, 15.0
          %v947 = vmin.f32 %v915, 15.0
          %v948 = vmin.f32 %v916, 15.0
          %v949 = vsub.f32 %v917, %v773
          %v950 = vsub.f32 %v918, %v773
          %v951 = vsub.f32 %v919, %v774
          %v952 = vsub.f32 %v920, %v774
          %v953 = vsub.f32 %v921, %v775
          %v954 = vsub.f32 %v922, %v775
          %v955 = vsub.f32 %v923, %v776
          %v956 = vsub.f32 %v924, %v776
          %v957 = vsub.f32 %v925, %v777
          %v958 = vsub.f32 %v926, %v777
          %v959 = vsub.f32 %v927, %v778
          %v960 = vsub.f32 %v928, %v778
          %v961 = vsub.f32 %v929, %v779
          %v962 = vsub.f32 %v930, %v779
          %v963 = vsub.f32 %v931, %v780
          %v964 = vsub.f32 %v932, %v780
          %v965 = vsub.f32 %v933, %v781
          %v966 = vsub.f32 %v934, %v781
          %v967 = vsub.f32 %v935, %v782
          %v968 = vsub.f32 %v936, %v782
          %v969 = vsub.f32 %v937, %v783
          %v970 = vsub.f32 %v938, %v783
          %v971 = vsub.f32 %v939, %v784
          %v972 = vsub.f32 %v940, %v784
          %v973 = vsub.f32 %v941, %v785
          %v974 = vsub.f32 %v942, %v785
          %v975 = vsub.f32 %v943, %v786
          %v976 = vsub.f32 %v944, %v786
          %v977 = vsub.f32 %v945, %v787
          %v978 = vsub.f32 %v946, %v787
          %v979 = vsub.f32 %v947, %v788
          %v980 = vsub.f32 %v948, %v788
          %v981 = vmul.f32 %v693, %v949
          %v982 = vmul.f32 %v693, %v950
          %v983 = vmul.f32 %v694, %v951
          %v984 = vmul.f32 %v694, %v952
          %v985 = vmul.f32 %v695, %v953
          %v986 = vmul.f32 %v695, %v954
          %v987 = vmul.f32 %v696, %v955
          %v988 = vmul.f32 %v696, %v956
          %v989 = vmul.f32 %v697, %v957
          %v990 = vmul.f32 %v697, %v958
          %v991 = vmul.f32 %v698, %v959
          %v992 = vmul.f32 %v698, %v960
          %v993 = vmul.f32 %v699, %v961
          %v994 = vmul.f32 %v699, %v962
          %v995 = vmul.f32 %v700, %v963
          %v996 = vmul.f32 %v700, %v964
          %v997 = vmul.f32 %v701, %v965
          %v998 = vmul.f32 %v701, %v966
          %v999 = vmul.f32 %v702, %v967
          %v1000 = vmul.f32 %v702, %v968
          %v1001 = vmul.f32 %v703, %v969
          %v1002 = vmul.f32 %v703, %v970
          %v1003 = vmul.f32 %v704, %v971
          %v1004 = vmul.f32 %v704, %v972
          %v1005 = vmul.f32 %v705, %v973
          %v1006 = vmul.f32 %v705, %v974
          %v1007 = vmul.f32 %v706, %v975
          %v1008 = vmul.f32 %v706, %v976
          %v1009 = vmul.f32 %v707, %v977
          %v1010 = vmul.f32 %v707, %v978
          %v1011 = vmul.f32 %v708, %v979
          %v1012 = vmul.f32 %v708, %v980
          %v1013 = vsel %vm403, %v981, %v360
          %v1014 = vsel %vm404, %v982, %v361
          %v1015 = vsel %vm403, %v983, %v362
          %v1016 = vsel %vm404, %v984, %v363
          %v1017 = vsel %vm403, %v985, %v364
          %v1018 = vsel %vm404, %v986, %v365
          %v1019 = vsel %vm403, %v987, %v366
          %v1020 = vsel %vm404, %v988, %v367
          %v1021 = vsel %vm403, %v989, %v368
          %v1022 = vsel %vm404, %v990, %v369
          %v1023 = vsel %vm403, %v991, %v370
          %v1024 = vsel %vm404, %v992, %v371
          %v1025 = vsel %vm403, %v993, %v372
          %v1026 = vsel %vm404, %v994, %v373
          %v1027 = vsel %vm403, %v995, %v374
          %v1028 = vsel %vm404, %v996, %v375
          %v1029 = vsel %vm403, %v997, %v376
          %v1030 = vsel %vm404, %v998, %v377
          %v1031 = vsel %vm403, %v999, %v378
          %v1032 = vsel %vm404, %v1000, %v379
          %v1033 = vsel %vm403, %v1001, %v380
          %v1034 = vsel %vm404, %v1002, %v381
          %v1035 = vsel %vm403, %v1003, %v382
          %v1036 = vsel %vm404, %v1004, %v383
          %v1037 = vsel %vm403, %v1005, %v384
          %v1038 = vsel %vm404, %v1006, %v385
          %v1039 = vsel %vm403, %v1007, %v386
          %v1040 = vsel %vm404, %v1008, %v387
          %v1041 = vsel %vm403, %v1009, %v388
          %v1042 = vsel %vm404, %v1010, %v389
          %v1043 = vsel %vm403, %v1011, %v390
          %v1044 = vsel %vm404, %v1012, %v391
          %v1045 = vpack.c.bf16 %v1015, %v1013
          %v1046 = vpack.c.bf16 %v1016, %v1014
          %v1047 = vpack.c.bf16 %v1019, %v1017
          %v1048 = vpack.c.bf16 %v1020, %v1018
          %v1049 = vpack.c.bf16 %v1023, %v1021
          %v1050 = vpack.c.bf16 %v1024, %v1022
          %v1051 = vpack.c.bf16 %v1027, %v1025
          %v1052 = vpack.c.bf16 %v1028, %v1026
          %v1053 = vpack.c.bf16 %v1031, %v1029
          %v1054 = vpack.c.bf16 %v1032, %v1030
          %v1055 = vpack.c.bf16 %v1035, %v1033
          %v1056 = vpack.c.bf16 %v1036, %v1034
          %v1057 = vpack.c.bf16 %v1039, %v1037
          %v1058 = vpack.c.bf16 %v1040, %v1038
          %v1059 = vpack.c.bf16 %v1043, %v1041
          %v1060 = vpack.c.bf16 %v1044, %v1042
          %1061 = vst [vmem:[#allocation2] sm:$0xff] %v1045
          %1062 = vst [vmem:[#allocation2 + $0x8] sm:$0xff] %v1046
          %1063 = vst [vmem:[#allocation2 + $0x10] sm:$0xff] %v1047
          %1064 = vst [vmem:[#allocation2 + $0x18] sm:$0xff] %v1048
          %1065 = vst [vmem:[#allocation2 + $0x20] sm:$0xff] %v1049
          %1066 = vst [vmem:[#allocation2 + $0x28] sm:$0xff] %v1050
          %1067 = vst [vmem:[#allocation2 + $0x30] sm:$0xff] %v1051
          %1068 = vst [vmem:[#allocation2 + $0x38] sm:$0xff] %v1052
          %1069 = vst [vmem:[#allocation2 + $0x40] sm:$0xff] %v1053
          %1070 = vst [vmem:[#allocation2 + $0x48] sm:$0xff] %v1054
          %1071 = vst [vmem:[#allocation2 + $0x50] sm:$0xff] %v1055
          %1072 = vst [vmem:[#allocation2 + $0x58] sm:$0xff] %v1056
          %1073 = vst [vmem:[#allocation2 + $0x60] sm:$0xff] %v1057
          %1074 = vst [vmem:[#allocation2 + $0x68] sm:$0xff] %v1058
          %1075 = vst [vmem:[#allocation2 + $0x70] sm:$0xff] %v1059
          %1076 = vst [vmem:[#allocation2 + $0x78] sm:$0xff] %v1060
        $region56: #{tpu_custom_call.1} parent=35 // pred_fallthru
          _
        %v1077 = vld [vmem:[#allocation2] sm:$0xff]
        %v1078 = vld [vmem:[#allocation2 + $0x8] sm:$0xff]
        %v1079 = vld [vmem:[#allocation2 + $0x10] sm:$0xff]
        %v1080 = vld [vmem:[#allocation2 + $0x18] sm:$0xff]
        %v1081 = vld [vmem:[#allocation2 + $0x20] sm:$0xff]
        %v1082 = vld [vmem:[#allocation2 + $0x28] sm:$0xff]
        %v1083 = vld [vmem:[#allocation2 + $0x30] sm:$0xff]
        %v1084 = vld [vmem:[#allocation2 + $0x38] sm:$0xff]
        %v1085 = vld [vmem:[#allocation2 + $0x40] sm:$0xff]
        %v1086 = vld [vmem:[#allocation2 + $0x48] sm:$0xff]
        %v1087 = vld [vmem:[#allocation2 + $0x50] sm:$0xff]
        %v1088 = vld [vmem:[#allocation2 + $0x58] sm:$0xff]
        %v1089 = vld [vmem:[#allocation2 + $0x60] sm:$0xff]
        %v1090 = vld [vmem:[#allocation2 + $0x68] sm:$0xff]
        %v1091 = vld [vmem:[#allocation2 + $0x70] sm:$0xff]
        %v1092 = vld [vmem:[#allocation2 + $0x78] sm:$0xff]
        %v1093 = vld [vmem:[%s290] sm:$0xff]
        %v1094 = vld [vmem:[%s290 + $0x8] sm:$0xff]
        %v1095 = vld [vmem:[%s290 + $0x10] sm:$0xff]
        %v1096 = vld [vmem:[%s290 + $0x18] sm:$0xff]
        %v1097 = vld [vmem:[%s290 + $0x20] sm:$0xff]
        %v1098 = vld [vmem:[%s290 + $0x28] sm:$0xff]
        %v1099 = vld [vmem:[%s290 + $0x30] sm:$0xff]
        %v1100 = vld [vmem:[%s290 + $0x38] sm:$0xff]
        %v1101 = vld [vmem:[%s290 + $0x40] sm:$0xff]
        %v1102 = vld [vmem:[%s290 + $0x48] sm:$0xff]
        %v1103 = vld [vmem:[%s290 + $0x50] sm:$0xff]
        %v1104 = vld [vmem:[%s290 + $0x58] sm:$0xff]
        %v1105 = vld [vmem:[%s290 + $0x60] sm:$0xff]
        %v1106 = vld [vmem:[%s290 + $0x68] sm:$0xff]
        %v1107 = vld [vmem:[%s290 + $0x70] sm:$0xff]
        %v1108 = vld [vmem:[%s290 + $0x78] sm:$0xff]
        %v1109 = vld [vmem:[%s290 + $0x80] sm:$0xff]
        %v1110 = vld [vmem:[%s290 + $0x88] sm:$0xff]
        %v1111 = vld [vmem:[%s290 + $0x90] sm:$0xff]
        %v1112 = vld [vmem:[%s290 + $0x98] sm:$0xff]
        %v1113 = vld [vmem:[%s290 + $0xa0] sm:$0xff]
        %v1114 = vld [vmem:[%s290 + $0xa8] sm:$0xff]
        %v1115 = vld [vmem:[%s290 + $0xb0] sm:$0xff]
        %v1116 = vld [vmem:[%s290 + $0xb8] sm:$0xff]
        %v1117 = vld [vmem:[%s290 + $0xc0] sm:$0xff]
        %v1118 = vld [vmem:[%s290 + $0xc8] sm:$0xff]
        %v1119 = vld [vmem:[%s290 + $0xd0] sm:$0xff]
        %v1120 = vld [vmem:[%s290 + $0xd8] sm:$0xff]
        %v1121 = vld [vmem:[%s290 + $0xe0] sm:$0xff]
        %v1122 = vld [vmem:[%s290 + $0xe8] sm:$0xff]
        %v1123 = vld [vmem:[%s290 + $0xf0] sm:$0xff]
        %v1124 = vld [vmem:[%s290 + $0xf8] sm:$0xff]
        %v1125 = vld [vmem:[%s290 + $0x100] sm:$0xff]
        %v1126 = vld [vmem:[%s290 + $0x108] sm:$0xff]
        %v1127 = vld [vmem:[%s290 + $0x110] sm:$0xff]
        %v1128 = vld [vmem:[%s290 + $0x118] sm:$0xff]
        %v1129 = vld [vmem:[%s290 + $0x120] sm:$0xff]
        %v1130 = vld [vmem:[%s290 + $0x128] sm:$0xff]
        %v1131 = vld [vmem:[%s290 + $0x130] sm:$0xff]
        %v1132 = vld [vmem:[%s290 + $0x138] sm:$0xff]
        %v1133 = vld [vmem:[%s290 + $0x140] sm:$0xff]
        %v1134 = vld [vmem:[%s290 + $0x148] sm:$0xff]
        %v1135 = vld [vmem:[%s290 + $0x150] sm:$0xff]
        %v1136 = vld [vmem:[%s290 + $0x158] sm:$0xff]
        %v1137 = vld [vmem:[%s290 + $0x160] sm:$0xff]
        %v1138 = vld [vmem:[%s290 + $0x168] sm:$0xff]
        %v1139 = vld [vmem:[%s290 + $0x170] sm:$0xff]
        %v1140 = vld [vmem:[%s290 + $0x178] sm:$0xff]
        %v1141 = vld [vmem:[%s290 + $0x180] sm:$0xff]
        %v1142 = vld [vmem:[%s290 + $0x188] sm:$0xff]
        %v1143 = vld [vmem:[%s290 + $0x190] sm:$0xff]
        %v1144 = vld [vmem:[%s290 + $0x198] sm:$0xff]
        %v1145 = vld [vmem:[%s290 + $0x1a0] sm:$0xff]
        %v1146 = vld [vmem:[%s290 + $0x1a8] sm:$0xff]
        %v1147 = vld [vmem:[%s290 + $0x1b0] sm:$0xff]
        %v1148 = vld [vmem:[%s290 + $0x1b8] sm:$0xff]
        %v1149 = vld [vmem:[%s290 + $0x1c0] sm:$0xff]
        %v1150 = vld [vmem:[%s290 + $0x1c8] sm:$0xff]
        %v1151 = vld [vmem:[%s290 + $0x1d0] sm:$0xff]
        %v1152 = vld [vmem:[%s290 + $0x1d8] sm:$0xff]
        %v1153 = vld [vmem:[%s290 + $0x1e0] sm:$0xff]
        %v1154 = vld [vmem:[%s290 + $0x1e8] sm:$0xff]
        %v1155 = vld [vmem:[%s290 + $0x1f0] sm:$0xff]
        %v1156 = vld [vmem:[%s290 + $0x1f8] sm:$0xff]
        %v1157 = vld [vmem:[%s299] sm:$0xf]
        %v1159 = vlaneseq
        %v1160 = vshrl.u32 %v1159, 7
        %v1161 = vsub.s32 0, %v1160
        %v1162 = vrot.slane %v1157, %v1161
        %v1163 = vlaneseq
        %v1164 = vshrl.u32 %v1163, 7
        %v1165 = vsub.s32 1, %v1164
        %v1166 = vrot.slane %v1157, %v1165
        %v1167 = vlaneseq
        %v1168 = vshrl.u32 %v1167, 7
        %v1169 = vsub.s32 2, %v1168
        %v1170 = vrot.slane %v1157, %v1169
        %v1171 = vlaneseq
        %v1172 = vshrl.u32 %v1171, 7
        %v1173 = vsub.s32 3, %v1172
        %v1174 = vrot.slane %v1157, %v1173
        %v1243 = vunpack.c.l.b16 %v1093
        %v1244 = vunpack.c.h.b16 %v1093
        %v1245 = vunpack.c.l.b16 %v1094
        %v1246 = vunpack.c.h.b16 %v1094
        %v1247 = vunpack.c.l.b16 %v1095
        %v1248 = vunpack.c.h.b16 %v1095
        %v1249 = vunpack.c.l.b16 %v1096
        %v1250 = vunpack.c.h.b16 %v1096
        %v1251 = vunpack.c.l.b16 %v1097
        %v1252 = vunpack.c.h.b16 %v1097
        %v1253 = vunpack.c.l.b16 %v1098
        %v1254 = vunpack.c.h.b16 %v1098
        %v1255 = vunpack.c.l.b16 %v1099
        %v1256 = vunpack.c.h.b16 %v1099
        %v1257 = vunpack.c.l.b16 %v1100
        %v1258 = vunpack.c.h.b16 %v1100
        %v1259 = vunpack.c.l.b16 %v1101
        %v1260 = vunpack.c.h.b16 %v1101
        %v1261 = vunpack.c.l.b16 %v1102
        %v1262 = vunpack.c.h.b16 %v1102
        %v1263 = vunpack.c.l.b16 %v1103
        %v1264 = vunpack.c.h.b16 %v1103
        %v1265 = vunpack.c.l.b16 %v1104
        %v1266 = vunpack.c.h.b16 %v1104
        %v1267 = vunpack.c.l.b16 %v1105
        %v1268 = vunpack.c.h.b16 %v1105
        %v1269 = vunpack.c.l.b16 %v1106
        %v1270 = vunpack.c.h.b16 %v1106
        %v1271 = vunpack.c.l.b16 %v1107
        %v1272 = vunpack.c.h.b16 %v1107
        %v1273 = vunpack.c.l.b16 %v1108
        %v1274 = vunpack.c.h.b16 %v1108
        %v1275 = vunpack.c.l.b16 %v1109
        %v1276 = vunpack.c.h.b16 %v1109
        %v1277 = vunpack.c.l.b16 %v1110
        %v1278 = vunpack.c.h.b16 %v1110
        %v1279 = vunpack.c.l.b16 %v1111
        %v1280 = vunpack.c.h.b16 %v1111
        %v1281 = vunpack.c.l.b16 %v1112
        %v1282 = vunpack.c.h.b16 %v1112
        %v1283 = vunpack.c.l.b16 %v1113
        %v1284 = vunpack.c.h.b16 %v1113
        %v1285 = vunpack.c.l.b16 %v1114
        %v1286 = vunpack.c.h.b16 %v1114
        %v1287 = vunpack.c.l.b16 %v1115
        %v1288 = vunpack.c.h.b16 %v1115
        %v1289 = vunpack.c.l.b16 %v1116
        %v1290 = vunpack.c.h.b16 %v1116
        %v1291 = vunpack.c.l.b16 %v1117
        %v1292 = vunpack.c.h.b16 %v1117
        %v1293 = vunpack.c.l.b16 %v1118
        %v1294 = vunpack.c.h.b16 %v1118
        %v1295 = vunpack.c.l.b16 %v1119
        %v1296 = vunpack.c.h.b16 %v1119
        %v1297 = vunpack.c.l.b16 %v1120
        %v1298 = vunpack.c.h.b16 %v1120
        %v1299 = vunpack.c.l.b16 %v1121
        %v1300 = vunpack.c.h.b16 %v1121
        %v1301 = vunpack.c.l.b16 %v1122
        %v1302 = vunpack.c.h.b16 %v1122
        %v1303 = vunpack.c.l.b16 %v1123
        %v1304 = vunpack.c.h.b16 %v1123
        %v1305 = vunpack.c.l.b16 %v1124
        %v1306 = vunpack.c.h.b16 %v1124
        %v1307 = vunpack.c.l.b16 %v1125
        %v1308 = vunpack.c.h.b16 %v1125
        %v1309 = vunpack.c.l.b16 %v1126
        %v1310 = vunpack.c.h.b16 %v1126
        %v1311 = vunpack.c.l.b16 %v1127
        %v1312 = vunpack.c.h.b16 %v1127
        %v1313 = vunpack.c.l.b16 %v1128
        %v1314 = vunpack.c.h.b16 %v1128
        %v1315 = vunpack.c.l.b16 %v1129
        %v1316 = vunpack.c.h.b16 %v1129
        %v1317 = vunpack.c.l.b16 %v1130
        %v1318 = vunpack.c.h.b16 %v1130
        %v1319 = vunpack.c.l.b16 %v1131
        %v1320 = vunpack.c.h.b16 %v1131
        %v1321 = vunpack.c.l.b16 %v1132
        %v1322 = vunpack.c.h.b16 %v1132
        %v1323 = vunpack.c.l.b16 %v1133
        %v1324 = vunpack.c.h.b16 %v1133
        %v1325 = vunpack.c.l.b16 %v1134
        %v1326 = vunpack.c.h.b16 %v1134
        %v1327 = vunpack.c.l.b16 %v1135
        %v1328 = vunpack.c.h.b16 %v1135
        %v1329 = vunpack.c.l.b16 %v1136
        %v1330 = vunpack.c.h.b16 %v1136
        %v1331 = vunpack.c.l.b16 %v1137
        %v1332 = vunpack.c.h.b16 %v1137
        %v1333 = vunpack.c.l.b16 %v1138
        %v1334 = vunpack.c.h.b16 %v1138
        %v1335 = vunpack.c.l.b16 %v1139
        %v1336 = vunpack.c.h.b16 %v1139
        %v1337 = vunpack.c.l.b16 %v1140
        %v1338 = vunpack.c.h.b16 %v1140
        %v1339 = vunpack.c.l.b16 %v1141
        %v1340 = vunpack.c.h.b16 %v1141
        %v1341 = vunpack.c.l.b16 %v1142
        %v1342 = vunpack.c.h.b16 %v1142
        %v1343 = vunpack.c.l.b16 %v1143
        %v1344 = vunpack.c.h.b16 %v1143
        %v1345 = vunpack.c.l.b16 %v1144
        %v1346 = vunpack.c.h.b16 %v1144
        %v1347 = vunpack.c.l.b16 %v1145
        %v1348 = vunpack.c.h.b16 %v1145
        %v1349 = vunpack.c.l.b16 %v1146
        %v1350 = vunpack.c.h.b16 %v1146
        %v1351 = vunpack.c.l.b16 %v1147
        %v1352 = vunpack.c.h.b16 %v1147
        %v1353 = vunpack.c.l.b16 %v1148
        %v1354 = vunpack.c.h.b16 %v1148
        %v1355 = vunpack.c.l.b16 %v1149
        %v1356 = vunpack.c.h.b16 %v1149
        %v1357 = vunpack.c.l.b16 %v1150
        %v1358 = vunpack.c.h.b16 %v1150
        %v1359 = vunpack.c.l.b16 %v1151
        %v1360 = vunpack.c.h.b16 %v1151
        %v1361 = vunpack.c.l.b16 %v1152
        %v1362 = vunpack.c.h.b16 %v1152
        %v1363 = vunpack.c.l.b16 %v1153
        %v1364 = vunpack.c.h.b16 %v1153
        %v1365 = vunpack.c.l.b16 %v1154
        %v1366 = vunpack.c.h.b16 %v1154
        %v1367 = vunpack.c.l.b16 %v1155
        %v1368 = vunpack.c.h.b16 %v1155
        %v1369 = vunpack.c.l.b16 %v1156
        %v1370 = vunpack.c.h.b16 %v1156
        %v1371 = vpack.c.b16 %v1247, %v1243
        %v1372 = vpack.c.b16 %v1248, %v1244
        %v1373 = vpack.c.b16 %v1249, %v1245
        %v1374 = vpack.c.b16 %v1250, %v1246
        %v1375 = vpack.c.b16 %v1255, %v1251
        %v1376 = vpack.c.b16 %v1256, %v1252
        %v1377 = vpack.c.b16 %v1257, %v1253
        %v1378 = vpack.c.b16 %v1258, %v1254
        %v1379 = vpack.c.b16 %v1263, %v1259
        %v1380 = vpack.c.b16 %v1264, %v1260
        %v1381 = vpack.c.b16 %v1265, %v1261
        %v1382 = vpack.c.b16 %v1266, %v1262
        %v1383 = vpack.c.b16 %v1271, %v1267
        %v1384 = vpack.c.b16 %v1272, %v1268
        %v1385 = vpack.c.b16 %v1273, %v1269
        %v1386 = vpack.c.b16 %v1274, %v1270
        %v1387 = vpack.c.b16 %v1279, %v1275
        %v1388 = vpack.c.b16 %v1280, %v1276
        %v1389 = vpack.c.b16 %v1281, %v1277
        %v1390 = vpack.c.b16 %v1282, %v1278
        %v1391 = vpack.c.b16 %v1287, %v1283
        %v1392 = vpack.c.b16 %v1288, %v1284
        %v1393 = vpack.c.b16 %v1289, %v1285
        %v1394 = vpack.c.b16 %v1290, %v1286
        %v1395 = vpack.c.b16 %v1295, %v1291
        %v1396 = vpack.c.b16 %v1296, %v1292
        %v1397 = vpack.c.b16 %v1297, %v1293
        %v1398 = vpack.c.b16 %v1298, %v1294
        %v1399 = vpack.c.b16 %v1303, %v1299
        %v1400 = vpack.c.b16 %v1304, %v1300
        %v1401 = vpack.c.b16 %v1305, %v1301
        %v1402 = vpack.c.b16 %v1306, %v1302
        %v1403 = vpack.c.b16 %v1311, %v1307
        %v1404 = vpack.c.b16 %v1312, %v1308
        %v1405 = vpack.c.b16 %v1313, %v1309
        %v1406 = vpack.c.b16 %v1314, %v1310
        %v1407 = vpack.c.b16 %v1319, %v1315
        %v1408 = vpack.c.b16 %v1320, %v1316
        %v1409 = vpack.c.b16 %v1321, %v1317
        %v1410 = vpack.c.b16 %v1322, %v1318
        %v1411 = vpack.c.b16 %v1327, %v1323
        %v1412 = vpack.c.b16 %v1328, %v1324
        %v1413 = vpack.c.b16 %v1329, %v1325
        %v1414 = vpack.c.b16 %v1330, %v1326
        %v1415 = vpack.c.b16 %v1335, %v1331
        %v1416 = vpack.c.b16 %v1336, %v1332
        %v1417 = vpack.c.b16 %v1337, %v1333
        %v1418 = vpack.c.b16 %v1338, %v1334
        %v1419 = vpack.c.b16 %v1343, %v1339
        %v1420 = vpack.c.b16 %v1344, %v1340
        %v1421 = vpack.c.b16 %v1345, %v1341
        %v1422 = vpack.c.b16 %v1346, %v1342
        %v1423 = vpack.c.b16 %v1351, %v1347
        %v1424 = vpack.c.b16 %v1352, %v1348
        %v1425 = vpack.c.b16 %v1353, %v1349
        %v1426 = vpack.c.b16 %v1354, %v1350
        %v1427 = vpack.c.b16 %v1359, %v1355
        %v1428 = vpack.c.b16 %v1360, %v1356
        %v1429 = vpack.c.b16 %v1361, %v1357
        %v1430 = vpack.c.b16 %v1362, %v1358
        %v1431 = vpack.c.b16 %v1367, %v1363
        %v1432 = vpack.c.b16 %v1368, %v1364
        %v1433 = vpack.c.b16 %v1369, %v1365
        %v1434 = vpack.c.b16 %v1370, %v1366
        %1499 = vmatprep.subr.bf16.mxu0 %v1372
        %1500 = vmatpush1.bf16.msra.mxu0 %v1371
        %1501 = vmatprep.subr.bf16.mxu0 %v1376
        %1502 = vmatpush1.bf16.msra.mxu0 %v1375
        %1503 = vmatprep.subr.bf16.mxu0 %v1380
        %1504 = vmatpush1.bf16.msra.mxu0 %v1379
        %1505 = vmatprep.subr.bf16.mxu0 %v1384
        %1506 = vmatpush1.bf16.msra.mxu0 %v1383
        %1507 = vmatprep.subr.bf16.mxu0 %v1388
        %1508 = vmatpush1.bf16.msra.mxu0 %v1387
        %1509 = vmatprep.subr.bf16.mxu0 %v1392
        %1510 = vmatpush1.bf16.msra.mxu0 %v1391
        %1511 = vmatprep.subr.bf16.mxu0 %v1396
        %1512 = vmatpush1.bf16.msra.mxu0 %v1395
        %1513 = vmatprep.subr.bf16.mxu0 %v1400
        %1514 = vmatpush1.bf16.msra.mxu0 %v1399
        %1515 = vmatprep.subr.bf16.mxu0 %v1404
        %1516 = vmatpush1.bf16.msra.mxu0 %v1403
        %1517 = vmatprep.subr.bf16.mxu0 %v1408
        %1518 = vmatpush1.bf16.msra.mxu0 %v1407
        %1519 = vmatprep.subr.bf16.mxu0 %v1412
        %1520 = vmatpush1.bf16.msra.mxu0 %v1411
        %1521 = vmatprep.subr.bf16.mxu0 %v1416
        %1522 = vmatpush1.bf16.msra.mxu0 %v1415
        %1523 = vmatprep.subr.bf16.mxu0 %v1420
        %1524 = vmatpush1.bf16.msra.mxu0 %v1419
        %1525 = vmatprep.subr.bf16.mxu0 %v1424
        %1526 = vmatpush1.bf16.msra.mxu0 %v1423
        %1527 = vmatprep.subr.bf16.mxu0 %v1428
        %1528 = vmatpush1.bf16.msra.mxu0 %v1427
        %1529 = vmatprep.subr.bf16.mxu0 %v1432
        %1530 = vmatpush1.bf16.msra.mxu0 %v1431
        %1531 = vmatprep.mubr.bf16.mxu0 %v1078
        %1532 = vmatmul.mubr.bf16.gmra.mrb[0].mxu0 %v1077
        %v1533 = vpop.f32.mrb[0].mxu0
        %v1534 = vadd.f32 %v1162, %v1533
        %v1535 = vpop.f32.mrb[0].mxu0
        %v1536 = vadd.f32 %v1166, %v1535
        %v1537 = vpop.f32.mrb[0].mxu0
        %v1538 = vadd.f32 %v1162, %v1537
        %v1539 = vpop.f32.mrb[0].mxu0
        %v1540 = vadd.f32 %v1166, %v1539
        %1541 = vmatprep.mubr.bf16.mxu0 %v1080
        %1542 = vmatmul.mubr.bf16.gmra.mrb[0].mxu0 %v1079
        %v1543 = vpop.f32.mrb[0].mxu0
        %v1544 = vadd.f32 %v1162, %v1543
        %v1545 = vpop.f32.mrb[0].mxu0
        %v1546 = vadd.f32 %v1166, %v1545
        %v1547 = vpop.f32.mrb[0].mxu0
        %v1548 = vadd.f32 %v1162, %v1547
        %v1549 = vpop.f32.mrb[0].mxu0
        %v1550 = vadd.f32 %v1166, %v1549
        %1551 = vmatprep.mubr.bf16.mxu0 %v1082
        %1552 = vmatmul.mubr.bf16.gmra.mrb[0].mxu0 %v1081
        %v1553 = vpop.f32.mrb[0].mxu0
        %v1554 = vadd.f32 %v1162, %v1553
        %v1555 = vpop.f32.mrb[0].mxu0
        %v1556 = vadd.f32 %v1166, %v1555
        %v1557 = vpop.f32.mrb[0].mxu0
        %v1558 = vadd.f32 %v1162, %v1557
        %v1559 = vpop.f32.mrb[0].mxu0
        %v1560 = vadd.f32 %v1166, %v1559
        %1561 = vmatprep.mubr.bf16.mxu0 %v1084
        %1562 = vmatmul.mubr.bf16.gmra.mrb[0].mxu0 %v1083
        %v1563 = vpop.f32.mrb[0].mxu0
        %v1564 = vadd.f32 %v1162, %v1563
        %v1565 = vpop.f32.mrb[0].mxu0
        %v1566 = vadd.f32 %v1166, %v1565
        %v1567 = vpop.f32.mrb[0].mxu0
        %v1568 = vadd.f32 %v1162, %v1567
        %v1569 = vpop.f32.mrb[0].mxu0
        %v1570 = vadd.f32 %v1166, %v1569
        %1571 = vmatprep.mubr.bf16.mxu0 %v1086
        %1572 = vmatmul.mubr.bf16.gmra.mrb[0].mxu0 %v1085
        %v1573 = vpop.f32.mrb[0].mxu0
        %v1574 = vadd.f32 %v1162, %v1573
        %v1575 = vpop.f32.mrb[0].mxu0
        %v1576 = vadd.f32 %v1166, %v1575
        %v1577 = vpop.f32.mrb[0].mxu0
        %v1578 = vadd.f32 %v1162, %v1577
        %v1579 = vpop.f32.mrb[0].mxu0
        %v1580 = vadd.f32 %v1166, %v1579
        %1581 = vmatprep.mubr.bf16.mxu0 %v1088
        %1582 = vmatmul.mubr.bf16.gmra.mrb[0].mxu0 %v1087
        %v1583 = vpop.f32.mrb[0].mxu0
        %v1584 = vadd.f32 %v1162, %v1583
        %v1585 = vpop.f32.mrb[0].mxu0
        %v1586 = vadd.f32 %v1166, %v1585
        %v1587 = vpop.f32.mrb[0].mxu0
        %v1588 = vadd.f32 %v1162, %v1587
        %v1589 = vpop.f32.mrb[0].mxu0
        %v1590 = vadd.f32 %v1166, %v1589
        %1591 = vmatprep.mubr.bf16.mxu0 %v1090
        %1592 = vmatmul.mubr.bf16.gmra.mrb[0].mxu0 %v1089
        %v1593 = vpop.f32.mrb[0].mxu0
        %v1594 = vadd.f32 %v1162, %v1593
        %v1595 = vpop.f32.mrb[0].mxu0
        %v1596 = vadd.f32 %v1166, %v1595
        %v1597 = vpop.f32.mrb[0].mxu0
        %v1598 = vadd.f32 %v1162, %v1597
        %v1599 = vpop.f32.mrb[0].mxu0
        %v1600 = vadd.f32 %v1166, %v1599
        %1601 = vmatprep.mubr.bf16.mxu0 %v1092
        %1602 = vmatmul.mubr.bf16.gmra.mrb[0].mxu0 %v1091
        %v1603 = vpop.f32.mrb[0].mxu0
        %v1604 = vadd.f32 %v1162, %v1603
        %v1605 = vpop.f32.mrb[0].mxu0
        %v1606 = vadd.f32 %v1166, %v1605
        %v1607 = vpop.f32.mrb[0].mxu0
        %v1608 = vadd.f32 %v1162, %v1607
        %v1609 = vpop.f32.mrb[0].mxu0
        %v1610 = vadd.f32 %v1166, %v1609
        %1611 = vdwg.mxu0
        %1612 = vmatprep.subr.bf16.mxu0 %v1374
        %1613 = vmatpush1.bf16.msra.mxu0 %v1373
        %1614 = vmatprep.subr.bf16.mxu0 %v1378
        %1615 = vmatpush1.bf16.msra.mxu0 %v1377
        %1616 = vmatprep.subr.bf16.mxu0 %v1382
        %1617 = vmatpush1.bf16.msra.mxu0 %v1381
        %1618 = vmatprep.subr.bf16.mxu0 %v1386
        %1619 = vmatpush1.bf16.msra.mxu0 %v1385
        %1620 = vmatprep.subr.bf16.mxu0 %v1390
        %1621 = vmatpush1.bf16.msra.mxu0 %v1389
        %1622 = vmatprep.subr.bf16.mxu0 %v1394
        %1623 = vmatpush1.bf16.msra.mxu0 %v1393
        %1624 = vmatprep.subr.bf16.mxu0 %v1398
        %1625 = vmatpush1.bf16.msra.mxu0 %v1397
        %1626 = vmatprep.subr.bf16.mxu0 %v1402
        %1627 = vmatpush1.bf16.msra.mxu0 %v1401
        %1628 = vmatprep.subr.bf16.mxu0 %v1406
        %1629 = vmatpush1.bf16.msra.mxu0 %v1405
        %1630 = vmatprep.subr.bf16.mxu0 %v1410
        %1631 = vmatpush1.bf16.msra.mxu0 %v1409
        %1632 = vmatprep.subr.bf16.mxu0 %v1414
        %1633 = vmatpush1.bf16.msra.mxu0 %v1413
        %1634 = vmatprep.subr.bf16.mxu0 %v1418
        %1635 = vmatpush1.bf16.msra.mxu0 %v1417
        %1636 = vmatprep.subr.bf16.mxu0 %v1422
        %1637 = vmatpush1.bf16.msra.mxu0 %v1421
        %1638 = vmatprep.subr.bf16.mxu0 %v1426
        %1639 = vmatpush1.bf16.msra.mxu0 %v1425
        %1640 = vmatprep.subr.bf16.mxu0 %v1430
        %1641 = vmatpush1.bf16.msra.mxu0 %v1429
        %1642 = vmatprep.subr.bf16.mxu0 %v1434
        %1643 = vmatpush1.bf16.msra.mxu0 %v1433
        %1644 = vmatprep.mubr.bf16.mxu0 %v1078
        %1645 = vmatmul.mubr.bf16.gmra.mrb[0].mxu0 %v1077
        %v1646 = vpop.f32.mrb[0].mxu0
        %v1647 = vadd.f32 %v1170, %v1646
        %v1648 = vpop.f32.mrb[0].mxu0
        %v1649 = vadd.f32 %v1174, %v1648
        %v1650 = vpop.f32.mrb[0].mxu0
        %v1651 = vadd.f32 %v1170, %v1650
        %v1652 = vpop.f32.mrb[0].mxu0
        %v1653 = vadd.f32 %v1174, %v1652
        %1654 = vmatprep.mubr.bf16.mxu0 %v1080
        %1655 = vmatmul.mubr.bf16.gmra.mrb[0].mxu0 %v1079
        %v1656 = vpop.f32.mrb[0].mxu0
        %v1657 = vadd.f32 %v1170, %v1656
        %v1658 = vpop.f32.mrb[0].mxu0
        %v1659 = vadd.f32 %v1174, %v1658
        %v1660 = vpop.f32.mrb[0].mxu0
        %v1661 = vadd.f32 %v1170, %v1660
        %v1662 = vpop.f32.mrb[0].mxu0
        %v1663 = vadd.f32 %v1174, %v1662
        %1664 = vmatprep.mubr.bf16.mxu0 %v1082
        %1665 = vmatmul.mubr.bf16.gmra.mrb[0].mxu0 %v1081
        %v1666 = vpop.f32.mrb[0].mxu0
        %v1667 = vadd.f32 %v1170, %v1666
        %v1668 = vpop.f32.mrb[0].mxu0
        %v1669 = vadd.f32 %v1174, %v1668
        %v1670 = vpop.f32.mrb[0].mxu0
        %v1671 = vadd.f32 %v1170, %v1670
        %v1672 = vpop.f32.mrb[0].mxu0
        %v1673 = vadd.f32 %v1174, %v1672
        %1674 = vmatprep.mubr.bf16.mxu0 %v1084
        %1675 = vmatmul.mubr.bf16.gmra.mrb[0].mxu0 %v1083
        %v1676 = vpop.f32.mrb[0].mxu0
        %v1677 = vadd.f32 %v1170, %v1676
        %v1678 = vpop.f32.mrb[0].mxu0
        %v1679 = vadd.f32 %v1174, %v1678
        %v1680 = vpop.f32.mrb[0].mxu0
        %v1681 = vadd.f32 %v1170, %v1680
        %v1682 = vpop.f32.mrb[0].mxu0
        %v1683 = vadd.f32 %v1174, %v1682
        %1684 = vmatprep.mubr.bf16.mxu0 %v1086
        %1685 = vmatmul.mubr.bf16.gmra.mrb[0].mxu0 %v1085
        %v1686 = vpop.f32.mrb[0].mxu0
        %v1687 = vadd.f32 %v1170, %v1686
        %v1688 = vpop.f32.mrb[0].mxu0
        %v1689 = vadd.f32 %v1174, %v1688
        %v1690 = vpop.f32.mrb[0].mxu0
        %v1691 = vadd.f32 %v1170, %v1690
        %v1692 = vpop.f32.mrb[0].mxu0
        %v1693 = vadd.f32 %v1174, %v1692
        %1694 = vmatprep.mubr.bf16.mxu0 %v1088
        %1695 = vmatmul.mubr.bf16.gmra.mrb[0].mxu0 %v1087
        %v1696 = vpop.f32.mrb[0].mxu0
        %v1697 = vadd.f32 %v1170, %v1696
        %v1698 = vpop.f32.mrb[0].mxu0
        %v1699 = vadd.f32 %v1174, %v1698
        %v1700 = vpop.f32.mrb[0].mxu0
        %v1701 = vadd.f32 %v1170, %v1700
        %v1702 = vpop.f32.mrb[0].mxu0
        %v1703 = vadd.f32 %v1174, %v1702
        %1704 = vmatprep.mubr.bf16.mxu0 %v1090
        %1705 = vmatmul.mubr.bf16.gmra.mrb[0].mxu0 %v1089
        %v1706 = vpop.f32.mrb[0].mxu0
        %v1707 = vadd.f32 %v1170, %v1706
        %v1708 = vpop.f32.mrb[0].mxu0
        %v1709 = vadd.f32 %v1174, %v1708
        %v1710 = vpop.f32.mrb[0].mxu0
        %v1711 = vadd.f32 %v1170, %v1710
        %v1712 = vpop.f32.mrb[0].mxu0
        %v1713 = vadd.f32 %v1174, %v1712
        %1714 = vmatprep.mubr.bf16.mxu0 %v1092
        %1715 = vmatmul.mubr.bf16.gmra.mrb[0].mxu0 %v1091
        %v1716 = vpop.f32.mrb[0].mxu0
        %v1717 = vadd.f32 %v1170, %v1716
        %v1718 = vpop.f32.mrb[0].mxu0
        %v1719 = vadd.f32 %v1174, %v1718
        %v1720 = vpop.f32.mrb[0].mxu0
        %v1721 = vadd.f32 %v1170, %v1720
        %v1722 = vpop.f32.mrb[0].mxu0
        %v1723 = vadd.f32 %v1174, %v1722
        %1724 = vdwg.mxu0
        %1725 = vst [vmem:[%s337] sm:$0xff] %v1534
        %1726 = vst [vmem:[%s337 + $0x8] sm:$0xff] %v1536
        %1727 = vst [vmem:[%s337 + $0x10] sm:$0xff] %v1647
        %1728 = vst [vmem:[%s337 + $0x18] sm:$0xff] %v1649
        %1729 = vst [vmem:[%s337 + $0x20] sm:$0xff] %v1538
        %1730 = vst [vmem:[%s337 + $0x28] sm:$0xff] %v1540
        %1731 = vst [vmem:[%s337 + $0x30] sm:$0xff] %v1651
        %1732 = vst [vmem:[%s337 + $0x38] sm:$0xff] %v1653
        %1733 = vst [vmem:[%s337 + $0x40] sm:$0xff] %v1544
        %1734 = vst [vmem:[%s337 + $0x48] sm:$0xff] %v1546
        %1735 = vst [vmem:[%s337 + $0x50] sm:$0xff] %v1657
        %1736 = vst [vmem:[%s337 + $0x58] sm:$0xff] %v1659
        %1737 = vst [vmem:[%s337 + $0x60] sm:$0xff] %v1548
        %1738 = vst [vmem:[%s337 + $0x68] sm:$0xff] %v1550
        %1739 = vst [vmem:[%s337 + $0x70] sm:$0xff] %v1661
        %1740 = vst [vmem:[%s337 + $0x78] sm:$0xff] %v1663
        %1741 = vst [vmem:[%s337 + $0x80] sm:$0xff] %v1554
        %1742 = vst [vmem:[%s337 + $0x88] sm:$0xff] %v1556
        %1743 = vst [vmem:[%s337 + $0x90] sm:$0xff] %v1667
        %1744 = vst [vmem:[%s337 + $0x98] sm:$0xff] %v1669
        %1745 = vst [vmem:[%s337 + $0xa0] sm:$0xff] %v1558
        %1746 = vst [vmem:[%s337 + $0xa8] sm:$0xff] %v1560
        %1747 = vst [vmem:[%s337 + $0xb0] sm:$0xff] %v1671
        %1748 = vst [vmem:[%s337 + $0xb8] sm:$0xff] %v1673
        %1749 = vst [vmem:[%s337 + $0xc0] sm:$0xff] %v1564
        %1750 = vst [vmem:[%s337 + $0xc8] sm:$0xff] %v1566
        %1751 = vst [vmem:[%s337 + $0xd0] sm:$0xff] %v1677
        %1752 = vst [vmem:[%s337 + $0xd8] sm:$0xff] %v1679
        %1753 = vst [vmem:[%s337 + $0xe0] sm:$0xff] %v1568
        %1754 = vst [vmem:[%s337 + $0xe8] sm:$0xff] %v1570
        %1755 = vst [vmem:[%s337 + $0xf0] sm:$0xff] %v1681
        %1756 = vst [vmem:[%s337 + $0xf8] sm:$0xff] %v1683
        %1757 = vst [vmem:[%s337 + $0x100] sm:$0xff] %v1574
        %1758 = vst [vmem:[%s337 + $0x108] sm:$0xff] %v1576
        %1759 = vst [vmem:[%s337 + $0x110] sm:$0xff] %v1687
        %1760 = vst [vmem:[%s337 + $0x118] sm:$0xff] %v1689
        %1761 = vst [vmem:[%s337 + $0x120] sm:$0xff] %v1578
        %1762 = vst [vmem:[%s337 + $0x128] sm:$0xff] %v1580
        %1763 = vst [vmem:[%s337 + $0x130] sm:$0xff] %v1691
        %1764 = vst [vmem:[%s337 + $0x138] sm:$0xff] %v1693
        %1765 = vst [vmem:[%s337 + $0x140] sm:$0xff] %v1584
        %1766 = vst [vmem:[%s337 + $0x148] sm:$0xff] %v1586
        %1767 = vst [vmem:[%s337 + $0x150] sm:$0xff] %v1697
        %1768 = vst [vmem:[%s337 + $0x158] sm:$0xff] %v1699
        %1769 = vst [vmem:[%s337 + $0x160] sm:$0xff] %v1588
        %1770 = vst [vmem:[%s337 + $0x168] sm:$0xff] %v1590
        %1771 = vst [vmem:[%s337 + $0x170] sm:$0xff] %v1701
        %1772 = vst [vmem:[%s337 + $0x178] sm:$0xff] %v1703
        %1773 = vst [vmem:[%s337 + $0x180] sm:$0xff] %v1594
        %1774 = vst [vmem:[%s337 + $0x188] sm:$0xff] %v1596
        %1775 = vst [vmem:[%s337 + $0x190] sm:$0xff] %v1707
        %1776 = vst [vmem:[%s337 + $0x198] sm:$0xff] %v1709
        %1777 = vst [vmem:[%s337 + $0x1a0] sm:$0xff] %v1598
        %1778 = vst [vmem:[%s337 + $0x1a8] sm:$0xff] %v1600
        %1779 = vst [vmem:[%s337 + $0x1b0] sm:$0xff] %v1711
        %1780 = vst [vmem:[%s337 + $0x1b8] sm:$0xff] %v1713
        %1781 = vst [vmem:[%s337 + $0x1c0] sm:$0xff] %v1604
        %1782 = vst [vmem:[%s337 + $0x1c8] sm:$0xff] %v1606
        %1783 = vst [vmem:[%s337 + $0x1d0] sm:$0xff] %v1717
        %1784 = vst [vmem:[%s337 + $0x1d8] sm:$0xff] %v1719
        %1785 = vst [vmem:[%s337 + $0x1e0] sm:$0xff] %v1608
        %1786 = vst [vmem:[%s337 + $0x1e8] sm:$0xff] %v1610
        %1787 = vst [vmem:[%s337 + $0x1f0] sm:$0xff] %v1721
        %1788 = vst [vmem:[%s337 + $0x1f8] sm:$0xff] %v1723
        %s1789 = sand.u32 %s155, 1
        %s1790 = scalar_lea.sflag [#allocation5], %s1789
        %s1791 = sand.u32 %s155, 1
        %s1792 = smul.addr %s1791, 512
        %s1793 = scalar_lea.vmem [#allocation11], %s1792
        // Predicated region
        $region57: #{tpu_custom_call.1} parent=35 // pred_check
          %p1794 = pneg %p165
        $region58: #{tpu_custom_call.1} parent=35 // pred_check_branch
          %1796 = sbr.rel (%p1794) target = $region60
        $region59: #{tpu_custom_call.1} parent=35 // pred_region
          %s1797 = smul.u32 16, %s30
          %s1798 = smul.u32 4, %s31
          %s1799 = ssub.s32 25, %s1797
          %p1800 = scmp.lt.s32.totalorder %s1799, 16
          %s1801 = scalar_select %p1800, %s1799, 16
          %s1802 = smul.u32 128, %s1801
          %s1803 = smul.u32 %s1802, 4
          %s1805 = ssub.s32 8192, %s1803
          %1806 = vsyncadd %s1790, %s1805
          %p1807 = scmp.ne.s32.totalorder 0, %s1803
          %s1808 = smul.addr %s1797, 8
          %s1809 = sadd.s32 %s1798, %s1808
          %s1810 = smul.addr %s1809, 128
          %s1811 = scalar_lea.hbm %s4, %s1810
          %s1812 = smul.u32 32, %s1801
          %s1813 = sshll.u32 %s1793, 4
          %s1814 = int_to_ptr.vmem [resolvable:$true] %s1813
          %s1815 = sshll.u32 %s1812, 4
          %1819 = dma.vmem_to_hbm [thread:$0]  (%p1807), %s1814, %s1815, %s1811, %s1790, 512, 1024, 32
        $region60: #{tpu_custom_call.1} parent=35 // pred_fallthru
          _
      $region36: #{tpu_custom_call.1} parent=5 // pred_fallthru
        _
      %p1820 = scmp.le.s32.totalorder 2, %s20
      // Predicated region
      $region61: #{tpu_custom_call.1} parent=5 // pred_check
        %p1821 = pneg %p1820
      $region62: #{tpu_custom_call.1} parent=5 // pred_check_branch
        %1823 = sbr.rel (%p1821) target = $region64
      $region63: #{tpu_custom_call.1} parent=5 // pred_region
        %s1824 = ssub.s32 %s20, 2
        // Predicated region
        $region65: #{tpu_custom_call.1} parent=63 // pred_check
          %p1825 = pneg %p171
        $region66: #{tpu_custom_call.1} parent=63 // pred_check_branch
          %1827 = sbr.rel (%p1825) target = $region68
        $region67: #{tpu_custom_call.1} parent=63 // pred_region
          %s1828 = sand.u32 %s156, 1
          %s1829 = scalar_lea.sflag [#allocation5], %s1828
          %s1830 = sand.u32 %s156, 1
          %s1831 = smul.addr %s1830, 512
          %s1832 = scalar_lea.vmem [#allocation11], %s1831
          %1833 = dma.done %s1829, 8192
        $region68: #{tpu_custom_call.1} parent=63 // pred_fallthru
          _
      $region64: #{tpu_custom_call.1} parent=5 // pred_fallthru
        _
    $region6: #{tpu_custom_call.1} parent=1 // loop_footer
      %s24 = sadd.s32 1, %s20
    $region7: #{tpu_custom_call.1} parent=1 // loop_footer_branch
      %19 = sbr.rel target = $region3
    $region8: #{tpu_custom_call.1} parent=1 // loop_exit
      _
    %1834 = vsyncpa [#allocation4], 1
    %s1835 = scalar_lea.sflag [#allocation4], 1
    %1836 = vsyncpa %s1835, 1
    %1837 = vsyncpa [#allocation7], 1
    %s1838 = scalar_lea.sflag [#allocation7], 1
    %1839 = vsyncpa %s1838, 1
    %1840 = vsyncpa [#allocation10], 1
    %1841 = vsyncpa [#allocation5], 1
    %s1842 = scalar_lea.sflag [#allocation5], 1
    %1843 = vsyncpa %s1842, 1

</llo_original>
